<compile_context>
chip_gen: v7x
topology: tpu7x:2x2x1
jax: 0.10.0
libtpu: 0.0.40
codegen_flags: <defaults>
</compile_context>

<pallas_src>
import functools

import jax
import jax.numpy as jnp
from jax.experimental import pallas as pl
from jax.experimental.pallas import tpu as pltpu


def _round_up(n, m):
    return ((n + m - 1) // m) * m


def _tpu_generation():
    """Best-effort TPU generation number (0 if unknown / not a TPU)."""
    try:
        kind = jax.devices()[0].device_kind.lower()
    except Exception:
        return 0
    for gen in (7, 6, 5, 4, 3, 2):
        if f"v{gen}" in kind:
            return gen
    return 0


def _sigmoid_1eup(z):
    # sigmoid(z) = 0.5*tanh(0.5*z) + 0.5 : one EUP transcendental per element
    # (avoids an exp followed by a true divide landing on the VPU).
    return 0.5 * jnp.tanh(0.5 * z) + 0.5


def _silu_1eup(z):
    # silu(z) = z * sigmoid(z), still a single tanh per element.
    return z * _sigmoid_1eup(z)


def mlp_kernel(x_ref,
               w1_ref, b1_ref, w2_ref, b2_ref, w3_ref, b3_ref,
               w4_ref, b4_ref, w5_ref, b5_ref,
               o_ref, *, act_dtype, precision):
    """Whole MLP forward for one batch tile.

    x_ref is the natural (batch_tile, d_in) slab; every layer keeps the
    activation as (features, batch_tile) with batch on lanes.  Matmuls
    accumulate in f32 on the MXU; biases are f32; activation math runs in
    `act_dtype` (bf16 on v6e/v7x, f32 on v5e).
    """
    compute_dtype = w1_ref.dtype

    # Layer 1: contract x's feature axis directly (A @ B^T on the MXU) --
    # no wrapper-side transpose / pad pass over x in HBM.
    x = x_ref[...].astype(compute_dtype)                         # (T, d_in)
    z = jax.lax.dot_general(
        w1_ref[...], x,
        dimension_numbers=(((1,), (1,)), ((), ())),
        preferred_element_type=jnp.float32,
        precision=precision)                                     # (H1p, T)
    z = z + b1_ref[...]                                          # f32 bias, lane bcast
    h = _silu_1eup(z.astype(act_dtype)).astype(compute_dtype)

    for w_ref, b_ref in ((w2_ref, b2_ref), (w3_ref, b3_ref), (w4_ref, b4_ref)):
        z = jnp.dot(w_ref[...], h, preferred_element_type=jnp.float32,
                    precision=precision)
        z = z + b_ref[...]
        h = _silu_1eup(z.astype(act_dtype)).astype(compute_dtype)

    z = jnp.dot(w5_ref[...], h, preferred_element_type=jnp.float32,
                precision=precision) + b5_ref[...]
    # Final sigmoid in f32 (tiny 1 x T row), lane-dense store.
    o_ref[...] = _sigmoid_1eup(z).astype(o_ref.dtype)


def _pad_net_params(params, pack):
    """Zero-pad torch-layout params (W=(out,in), b=(out,)) for the kernel.

    * Layer-1 input dim stays at the true d_in so it matches the raw x blocks.
    * Hidden output dims are padded only to the sublane pack size (`pack`).
    * The last layer's output dim (1) is NOT padded -> lane-dense (1, T) output.
    Zero padding is inert: padded W rows/cols and biases are zero and
    silu(0) = 0, so padded activation rows remain exactly zero.
    """
    padded = []
    n = len(params)
    prev_out_pad = None
    for idx, (w, b) in enumerate(params):
        out_f, in_f = w.shape
        in_p = in_f if idx == 0 else prev_out_pad
        out_p = out_f if idx == n - 1 else _round_up(out_f, pack)
        w_p = jnp.zeros((out_p, in_p), jnp.float32).at[:out_f, :in_f].set(
            w.astype(jnp.float32))
        b_p = jnp.zeros((out_p, 1), jnp.float32).at[:out_f, 0].set(
            b.astype(jnp.float32))
        padded.append((w_p, b_p))
        prev_out_pad = out_p
    return padded


def net_forward(x, params, *, batch_tile=2048, compute_dtype=jnp.bfloat16):
    """x: (B, 50).  params: list of (W, b), torch layout W=(out,in), b=(out,).

    Default path: bf16 weights / MXU operands with f32 accumulation and f32
    biases.  compute_dtype=jnp.float32 gives a near-exact path (HIGHEST MXU
    precision).  Returns (B, 1) float32.
    """
    B, d_in = x.shape
    gen = _tpu_generation()

    # bf16 elementwise/EUP math only on v6e+ (v5e and older lack bf16 VPU/EUP).
    act_dtype = compute_dtype if (compute_dtype == jnp.bfloat16 and gen >= 6) \
        else jnp.float32
    # True-f32 MXU passes on the f32 accuracy path; default (bf16-native) else.
    precision = (jax.lax.Precision.HIGHEST
                 if compute_dtype == jnp.float32 else None)

    pack = 16 if compute_dtype == jnp.bfloat16 else 8
    padded = _pad_net_params(params, pack)
    d_out = padded[-1][0].shape[0]          # == 1

    # Batch rides the lane axis -> tiles are multiples of 128.
    b128 = _round_up(B, 128)
    tile = max(128, min(_round_up(batch_tile, 128), b128))
    # v7x has 2 TensorCores: make sure the "parallel" batch axis has >= 2 grid
    # steps so megacore actually shards it (single-TC v5e/v6e keep big tiles).
    min_steps = 2 if gen >= 7 else 1
    if min_steps > 1 and b128 > 128 and pl.cdiv(B, tile) < min_steps:
        tile = max(128, _round_up(pl.cdiv(b128, min_steps), 128))
    grid = (pl.cdiv(B, tile),)              # ragged last block is masked by Pallas

    flat_args = [x]                         # x stays in its HBM dtype; cast in-kernel
    in_specs = [pl.BlockSpec((tile, d_in), lambda i: (i, 0))]
    for (w_p, b_p) in padded:
        flat_args.append(w_p.astype(compute_dtype))
        flat_args.append(b_p)               # biases stay f32
        # Full-array blocks with constant index_map: DMA'd once, VMEM-resident.
        in_specs.append(pl.BlockSpec(w_p.shape, lambda i: (0, 0)))
        in_specs.append(pl.BlockSpec(b_p.shape, lambda i: (0, 0)))

    kernel = functools.partial(mlp_kernel, act_dtype=act_dtype,
                               precision=precision)

    out = pl.pallas_call(
        kernel,
        out_shape=jax.ShapeDtypeStruct((d_out, B), jnp.float32),
        grid=grid,
        in_specs=in_specs,
        out_specs=pl.BlockSpec((d_out, tile), lambda i: (0, i)),
        compiler_params=pltpu.CompilerParams(
            dimension_semantics=("parallel",),
            # Actual usage is a few MiB; 32 MiB fits every generation's scoped
            # budget (incl. v7x's 64 MiB physical).
            vmem_limit_bytes=32 * 1024 * 1024,
        ),
    )(*flat_args)

    # (1, B) lane-dense kernel output -> (B, 1); tiny wrapper-side transpose.
    return out.T


def init_params(key):
    """Deterministic init mirroring the torch module's layer shapes.

    Layer-1 weight uses kaiming_normal_ (std = sqrt(2/fan_in)) like the module;
    remaining weights/biases use torch Linear's default uniform(+-1/sqrt(fan_in)).
    Weights are kept in torch's (out, in) layout.
    """
    sizes = [(50, 240), (240, 120), (120, 60), (60, 40), (40, 1)]
    params = []
    for idx, (fan_in, fan_out) in enumerate(sizes):
        key, kw, kb = jax.random.split(key, 3)
        bound = 1.0 / float(fan_in) ** 0.5
        if idx == 0:
            w = (2.0 / fan_in) ** 0.5 * jax.random.normal(kw, (fan_out, fan_in))
        else:
            w = jax.random.uniform(kw, (fan_out, fan_in),
                                   minval=-bound, maxval=bound)
        b = jax.random.uniform(kb, (fan_out,), minval=-bound, maxval=bound)
        params.append((w.astype(jnp.float32), b.astype(jnp.float32)))
    return params


def net_forward_ref(x, params):
    """Pure-JAX f32 reference matching the torch forward."""
    h = x
    n = len(params)
    for i, (w, b) in enumerate(params):
        z = h @ w.T + b
        h = jax.nn.silu(z) if i < n - 1 else jax.nn.sigmoid(z)
    return h


if __name__ == "__main__":
    key = jax.random.PRNGKey(0)
    key, kx = jax.random.split(key)

    B = 200                                  # small, not a multiple of 128
    x = jax.random.normal(kx, (B, 50), dtype=jnp.float32)
    params = init_params(key)

    ref = net_forward_ref(x, params)

    # Default fast path: bf16 weights / MXU operands, f32 accumulation + biases.
    out_bf16 = jax.block_until_ready(net_forward(x, params))
    assert out_bf16.shape == (B, 1), out_bf16.shape
    assert jnp.allclose(out_bf16, ref, atol=5e-2), (
        float(jnp.max(jnp.abs(out_bf16 - ref))))

    # f32 accuracy path (HIGHEST MXU precision): near-exact vs. the reference.
    out_f32 = jax.block_until_ready(
        net_forward(x, params, compute_dtype=jnp.float32))
    assert out_f32.shape == (B, 1), out_f32.shape
    assert jnp.allclose(out_f32, ref, atol=5e-5, rtol=1e-4), (
        float(jnp.max(jnp.abs(out_f32 - ref))))

    print("KERNEL_OK")
</pallas_src>

<mosaic_0001>
module attributes {stable_mosaic.version = 11 : i64} {
  func.func @mlp_kernel(%arg0: i32, %arg1: memref<256x50xf32, #tpu.memory_space<vmem>>, %arg2: memref<240x50xbf16, #tpu.memory_space<vmem>>, %arg3: memref<240x1xf32, #tpu.memory_space<vmem>>, %arg4: memref<128x240xbf16, #tpu.memory_space<vmem>>, %arg5: memref<128x1xf32, #tpu.memory_space<vmem>>, %arg6: memref<64x128xbf16, #tpu.memory_space<vmem>>, %arg7: memref<64x1xf32, #tpu.memory_space<vmem>>, %arg8: memref<48x64xbf16, #tpu.memory_space<vmem>>, %arg9: memref<48x1xf32, #tpu.memory_space<vmem>>, %arg10: memref<1x48xbf16, #tpu.memory_space<vmem>>, %arg11: memref<1x1xf32, #tpu.memory_space<vmem>>, %arg12: memref<1x256xf32, #tpu.memory_space<vmem>>) attributes {dimension_semantics = [#tpu.dimension_semantics<parallel>], iteration_bounds = array<i64: 1>, scalar_prefetch = 0 : i64, scratch_operands = 0 : i64, tpu.core_type = #tpu.core_type<tc>, window_params = [{transform_indices = @transform_0, window_bounds = array<i64: 256, 50>}, {pipeline_mode = #tpu.pipeline_mode<synchronous>, transform_indices = @transform_1, window_bounds = array<i64: 240, 50>}, {pipeline_mode = #tpu.pipeline_mode<synchronous>, transform_indices = @transform_2, window_bounds = array<i64: 240, 1>}, {pipeline_mode = #tpu.pipeline_mode<synchronous>, transform_indices = @transform_3, window_bounds = array<i64: 128, 240>}, {pipeline_mode = #tpu.pipeline_mode<synchronous>, transform_indices = @transform_4, window_bounds = array<i64: 128, 1>}, {pipeline_mode = #tpu.pipeline_mode<synchronous>, transform_indices = @transform_5, window_bounds = array<i64: 64, 128>}, {pipeline_mode = #tpu.pipeline_mode<synchronous>, transform_indices = @transform_6, window_bounds = array<i64: 64, 1>}, {pipeline_mode = #tpu.pipeline_mode<synchronous>, transform_indices = @transform_7, window_bounds = array<i64: 48, 64>}, {pipeline_mode = #tpu.pipeline_mode<synchronous>, transform_indices = @transform_8, window_bounds = array<i64: 48, 1>}, {pipeline_mode = #tpu.pipeline_mode<synchronous>, transform_indices = @transform_9, window_bounds = array<i64: 1, 48>}, {pipeline_mode = #tpu.pipeline_mode<synchronous>, transform_indices = @transform_10, window_bounds = array<i64: 1, 1>}, {transform_indices = @transform_11, window_bounds = array<i64: 1, 256>}]} {
    %c0 = arith.constant 0 : index
    %c0_0 = arith.constant 0 : index
    %0 = vector.load %arg1[%c0, %c0_0] : memref<256x50xf32, #tpu.memory_space<vmem>>, vector<256x50xf32>
    %1 = arith.truncf %0 : vector<256x50xf32> to vector<256x50xbf16>
    %c0_1 = arith.constant 0 : index
    %c0_2 = arith.constant 0 : index
    %2 = vector.load %arg2[%c0_1, %c0_2] : memref<240x50xbf16, #tpu.memory_space<vmem>>, vector<240x50xbf16>
    %cst = arith.constant dense<0.000000e+00> : vector<240x256xf32>
    %3 = tpu.matmul %2, %1, %cst {dimension_numbers = #tpu.dot_dimension_numbers<[1], [1], [0], [0], [0, 0, 1, 0], [], []>} : vector<240x50xbf16>, vector<256x50xbf16>, vector<240x256xf32> -> vector<240x256xf32>
    %c0_3 = arith.constant 0 : index
    %c0_4 = arith.constant 0 : index
    %4 = vector.load %arg3[%c0_3, %c0_4] : memref<240x1xf32, #tpu.memory_space<vmem>>, vector<240x1xf32>
    %5 = vector.broadcast %4 : vector<240x1xf32> to vector<240x256xf32>
    %6 = arith.addf %3, %5 : vector<240x256xf32>
    %cst_5 = arith.constant 5.000000e-01 : f32
    %7 = vector.broadcast %cst_5 : f32 to vector<240x256xf32>
    %8 = arith.mulf %7, %6 : vector<240x256xf32>
    %9 = math.tanh %8 : vector<240x256xf32>
    %cst_6 = arith.constant 5.000000e-01 : f32
    %10 = vector.broadcast %cst_6 : f32 to vector<240x256xf32>
    %11 = arith.mulf %10, %9 : vector<240x256xf32>
    %cst_7 = arith.constant 5.000000e-01 : f32
    %12 = vector.broadcast %cst_7 : f32 to vector<240x256xf32>
    %13 = arith.addf %11, %12 : vector<240x256xf32>
    %14 = arith.mulf %6, %13 : vector<240x256xf32>
    %15 = arith.truncf %14 : vector<240x256xf32> to vector<240x256xbf16>
    %c0_8 = arith.constant 0 : index
    %c0_9 = arith.constant 0 : index
    %16 = vector.load %arg4[%c0_8, %c0_9] : memref<128x240xbf16, #tpu.memory_space<vmem>>, vector<128x240xbf16>
    %cst_10 = arith.constant dense<0.000000e+00> : vector<128x256xf32>
    %17 = tpu.matmul %16, %15, %cst_10 {dimension_numbers = #tpu.dot_dimension_numbers<[1], [0], [0], [1], [0, 0, 1, 1], [], []>} : vector<128x240xbf16>, vector<240x256xbf16>, vector<128x256xf32> -> vector<128x256xf32>
    %c0_11 = arith.constant 0 : index
    %c0_12 = arith.constant 0 : index
    %18 = vector.load %arg5[%c0_11, %c0_12] : memref<128x1xf32, #tpu.memory_space<vmem>>, vector<128x1xf32>
    %19 = vector.broadcast %18 : vector<128x1xf32> to vector<128x256xf32>
    %20 = arith.addf %17, %19 : vector<128x256xf32>
    %cst_13 = arith.constant 5.000000e-01 : f32
    %21 = vector.broadcast %cst_13 : f32 to vector<128x256xf32>
    %22 = arith.mulf %21, %20 : vector<128x256xf32>
    %23 = math.tanh %22 : vector<128x256xf32>
    %cst_14 = arith.constant 5.000000e-01 : f32
    %24 = vector.broadcast %cst_14 : f32 to vector<128x256xf32>
    %25 = arith.mulf %24, %23 : vector<128x256xf32>
    %cst_15 = arith.constant 5.000000e-01 : f32
    %26 = vector.broadcast %cst_15 : f32 to vector<128x256xf32>
    %27 = arith.addf %25, %26 : vector<128x256xf32>
    %28 = arith.mulf %20, %27 : vector<128x256xf32>
    %29 = arith.truncf %28 : vector<128x256xf32> to vector<128x256xbf16>
    %c0_16 = arith.constant 0 : index
    %c0_17 = arith.constant 0 : index
    %30 = vector.load %arg6[%c0_16, %c0_17] : memref<64x128xbf16, #tpu.memory_space<vmem>>, vector<64x128xbf16>
    %cst_18 = arith.constant dense<0.000000e+00> : vector<64x256xf32>
    %31 = tpu.matmul %30, %29, %cst_18 {dimension_numbers = #tpu.dot_dimension_numbers<[1], [0], [0], [1], [0, 0, 1, 1], [], []>} : vector<64x128xbf16>, vector<128x256xbf16>, vector<64x256xf32> -> vector<64x256xf32>
    %c0_19 = arith.constant 0 : index
    %c0_20 = arith.constant 0 : index
    %32 = vector.load %arg7[%c0_19, %c0_20] : memref<64x1xf32, #tpu.memory_space<vmem>>, vector<64x1xf32>
    %33 = vector.broadcast %32 : vector<64x1xf32> to vector<64x256xf32>
    %34 = arith.addf %31, %33 : vector<64x256xf32>
    %cst_21 = arith.constant 5.000000e-01 : f32
    %35 = vector.broadcast %cst_21 : f32 to vector<64x256xf32>
    %36 = arith.mulf %35, %34 : vector<64x256xf32>
    %37 = math.tanh %36 : vector<64x256xf32>
    %cst_22 = arith.constant 5.000000e-01 : f32
    %38 = vector.broadcast %cst_22 : f32 to vector<64x256xf32>
    %39 = arith.mulf %38, %37 : vector<64x256xf32>
    %cst_23 = arith.constant 5.000000e-01 : f32
    %40 = vector.broadcast %cst_23 : f32 to vector<64x256xf32>
    %41 = arith.addf %39, %40 : vector<64x256xf32>
    %42 = arith.mulf %34, %41 : vector<64x256xf32>
    %43 = arith.truncf %42 : vector<64x256xf32> to vector<64x256xbf16>
    %c0_24 = arith.constant 0 : index
    %c0_25 = arith.constant 0 : index
    %44 = vector.load %arg8[%c0_24, %c0_25] : memref<48x64xbf16, #tpu.memory_space<vmem>>, vector<48x64xbf16>
    %cst_26 = arith.constant dense<0.000000e+00> : vector<48x256xf32>
    %45 = tpu.matmul %44, %43, %cst_26 {dimension_numbers = #tpu.dot_dimension_numbers<[1], [0], [0], [1], [0, 0, 1, 1], [], []>} : vector<48x64xbf16>, vector<64x256xbf16>, vector<48x256xf32> -> vector<48x256xf32>
    %c0_27 = arith.constant 0 : index
    %c0_28 = arith.constant 0 : index
    %46 = vector.load %arg9[%c0_27, %c0_28] : memref<48x1xf32, #tpu.memory_space<vmem>>, vector<48x1xf32>
    %47 = vector.broadcast %46 : vector<48x1xf32> to vector<48x256xf32>
    %48 = arith.addf %45, %47 : vector<48x256xf32>
    %cst_29 = arith.constant 5.000000e-01 : f32
    %49 = vector.broadcast %cst_29 : f32 to vector<48x256xf32>
    %50 = arith.mulf %49, %48 : vector<48x256xf32>
    %51 = math.tanh %50 : vector<48x256xf32>
    %cst_30 = arith.constant 5.000000e-01 : f32
    %52 = vector.broadcast %cst_30 : f32 to vector<48x256xf32>
    %53 = arith.mulf %52, %51 : vector<48x256xf32>
    %cst_31 = arith.constant 5.000000e-01 : f32
    %54 = vector.broadcast %cst_31 : f32 to vector<48x256xf32>
    %55 = arith.addf %53, %54 : vector<48x256xf32>
    %56 = arith.mulf %48, %55 : vector<48x256xf32>
    %57 = arith.truncf %56 : vector<48x256xf32> to vector<48x256xbf16>
    %c0_32 = arith.constant 0 : index
    %c0_33 = arith.constant 0 : index
    %58 = vector.load %arg10[%c0_32, %c0_33] : memref<1x48xbf16, #tpu.memory_space<vmem>>, vector<1x48xbf16>
    %cst_34 = arith.constant dense<0.000000e+00> : vector<1x256xf32>
    %59 = tpu.matmul %58, %57, %cst_34 {dimension_numbers = #tpu.dot_dimension_numbers<[1], [0], [0], [1], [0, 0, 1, 1], [], []>} : vector<1x48xbf16>, vector<48x256xbf16>, vector<1x256xf32> -> vector<1x256xf32>
    %c0_35 = arith.constant 0 : index
    %c0_36 = arith.constant 0 : index
    %60 = vector.load %arg11[%c0_35, %c0_36] : memref<1x1xf32, #tpu.memory_space<vmem>>, vector<1x1xf32>
    %61 = vector.broadcast %60 : vector<1x1xf32> to vector<1x256xf32>
    %62 = arith.addf %59, %61 : vector<1x256xf32>
    %cst_37 = arith.constant 5.000000e-01 : f32
    %63 = vector.broadcast %cst_37 : f32 to vector<1x256xf32>
    %64 = arith.mulf %63, %62 : vector<1x256xf32>
    %65 = math.tanh %64 : vector<1x256xf32>
    %cst_38 = arith.constant 5.000000e-01 : f32
    %66 = vector.broadcast %cst_38 : f32 to vector<1x256xf32>
    %67 = arith.mulf %66, %65 : vector<1x256xf32>
    %cst_39 = arith.constant 5.000000e-01 : f32
    %68 = vector.broadcast %cst_39 : f32 to vector<1x256xf32>
    %69 = arith.addf %67, %68 : vector<1x256xf32>
    %c0_40 = arith.constant 0 : index
    %c0_41 = arith.constant 0 : index
    %70 = vector.load %arg12[%c0_40, %c0_41] : memref<1x256xf32, #tpu.memory_space<vmem>>, vector<1x256xf32>
    tpu.vector_store %arg12[%c0_40, %c0_41], %69 {strides = array<i32>} : memref<1x256xf32, #tpu.memory_space<vmem>>, vector<1x256xf32>,
    return
  }
  func.func @transform_0(%arg0: i32) -> (i32, i32) {
    %c0_i32 = arith.constant 0 : i32
    %c0_i32_0 = arith.constant 0 : i32
    return %arg0, %c0_i32 : i32, i32
  }
  func.func @transform_1(%arg0: i32) -> (i32, i32) {
    %c0_i32 = arith.constant 0 : i32
    %c0_i32_0 = arith.constant 0 : i32
    %c0_i32_1 = arith.constant 0 : i32
    return %c0_i32, %c0_i32_0 : i32, i32
  }
  func.func @transform_2(%arg0: i32) -> (i32, i32) {
    %c0_i32 = arith.constant 0 : i32
    %c0_i32_0 = arith.constant 0 : i32
    %c0_i32_1 = arith.constant 0 : i32
    return %c0_i32, %c0_i32_0 : i32, i32
  }
  func.func @transform_3(%arg0: i32) -> (i32, i32) {
    %c0_i32 = arith.constant 0 : i32
    %c0_i32_0 = arith.constant 0 : i32
    %c0_i32_1 = arith.constant 0 : i32
    return %c0_i32, %c0_i32_0 : i32, i32
  }
  func.func @transform_4(%arg0: i32) -> (i32, i32) {
    %c0_i32 = arith.constant 0 : i32
    %c0_i32_0 = arith.constant 0 : i32
    %c0_i32_1 = arith.constant 0 : i32
    return %c0_i32, %c0_i32_0 : i32, i32
  }
  func.func @transform_5(%arg0: i32) -> (i32, i32) {
    %c0_i32 = arith.constant 0 : i32
    %c0_i32_0 = arith.constant 0 : i32
    %c0_i32_1 = arith.constant 0 : i32
    return %c0_i32, %c0_i32_0 : i32, i32
  }
  func.func @transform_6(%arg0: i32) -> (i32, i32) {
    %c0_i32 = arith.constant 0 : i32
    %c0_i32_0 = arith.constant 0 : i32
    %c0_i32_1 = arith.constant 0 : i32
    return %c0_i32, %c0_i32_0 : i32, i32
  }
  func.func @transform_7(%arg0: i32) -> (i32, i32) {
    %c0_i32 = arith.constant 0 : i32
    %c0_i32_0 = arith.constant 0 : i32
    %c0_i32_1 = arith.constant 0 : i32
    return %c0_i32, %c0_i32_0 : i32, i32
  }
  func.func @transform_8(%arg0: i32) -> (i32, i32) {
    %c0_i32 = arith.constant 0 : i32
    %c0_i32_0 = arith.constant 0 : i32
    %c0_i32_1 = arith.constant 0 : i32
    return %c0_i32, %c0_i32_0 : i32, i32
  }
  func.func @transform_9(%arg0: i32) -> (i32, i32) {
    %c0_i32 = arith.constant 0 : i32
    %c0_i32_0 = arith.constant 0 : i32
    %c0_i32_1 = arith.constant 0 : i32
    return %c0_i32, %c0_i32_0 : i32, i32
  }
  func.func @transform_10(%arg0: i32) -> (i32, i32) {
    %c0_i32 = arith.constant 0 : i32
    %c0_i32_0 = arith.constant 0 : i32
    %c0_i32_1 = arith.constant 0 : i32
    return %c0_i32, %c0_i32_0 : i32, i32
  }
  func.func @transform_11(%arg0: i32) -> (i32, i32) {
    %c0_i32 = arith.constant 0 : i32
    %c0_i32_0 = arith.constant 0 : i32
    return %c0_i32, %arg0 : i32, i32
  }
}

</mosaic_0001>

<llo_original>
// kernel: tpu_custom_call.1
$region0: #{tpu_custom_call.1}
  #allocation0 [shape = 'u32[]', space=smem, size = 0x4, offset = 0x4, fixed_abs, tag = 'smem constant byte address 0x4 - core index']
  #allocation1 [shape = 'u32[144,128]{1,0:T(1,128)}', space=vmem, size = 0x12000, scoped, tag = 'internal scratch']
  #allocation2 [shape = 'f32[1,1]{1,0:T(1,128)S(1)}', space=vmem, size = 0x200, scoped, tag = 'scoped memory for tpu_custom_call.1']
  %s0 = inlined_call_operand.vmem [shape: f32[200,50], index: 0, kind: input, shape index: {}]
  %s1 = inlined_call_operand.vmem [shape: bf16[240,50], index: 1, kind: input, shape index: {}]
  %s2 = inlined_call_operand.vmem [shape: f32[240,1], index: 2, kind: input, shape index: {}]
  %s3 = inlined_call_operand.vmem [shape: bf16[128,240], index: 3, kind: input, shape index: {}]
  %s4 = inlined_call_operand.vmem [shape: f32[128,1], index: 4, kind: input, shape index: {}]
  %s5 = inlined_call_operand.vmem [shape: bf16[64,128], index: 5, kind: input, shape index: {}]
  %s6 = inlined_call_operand.vmem [shape: f32[64,1], index: 6, kind: input, shape index: {}]
  %s7 = inlined_call_operand.vmem [shape: bf16[48,64], index: 7, kind: input, shape index: {}]
  %s8 = inlined_call_operand.vmem [shape: f32[48,1], index: 8, kind: input, shape index: {}]
  %s9 = inlined_call_operand.vmem [shape: bf16[1,48], index: 9, kind: input, shape index: {}]
  %s10 = inlined_call_operand.<no memory space> [shape: f32[1,1], index: 10, kind: input, shape index: {}]
  %s11 = inlined_call_operand.hbm [shape: f32[1,200], index: 11, kind: output, shape index: {}]
  %s12 = sld [smem:[#allocation0]]
  $region54: #{tpu_custom_call.1} parent=0
    _
  %s14 = ssub.s32 1, %s12
  %s15 = scalar_select 0, %s14, %s12
  %v16 = vstv %s10
  %17 = vst [vmem:[#allocation2] sm:$0x1] %v16
  $region1: #{tpu_custom_call.1} parent=0
    #allocation3 [shape = 'u8[1024]{0}', space=vmem, size = 0x400, scoped, tag = 'output window, operand 0, single buffered']
    #allocation4 [shape = 's32[1]{0}', space=sflag, size = 0x4, scoped, tag = 'scoped memory for tpu_custom_call.1']
    %18 = vsyncpa [#allocation4], 0
    // Predicated region
    $region2: #{tpu_custom_call.1} parent=1 // pred_check
      _
    $region3: #{tpu_custom_call.1} parent=1 // pred_check_branch
      %20 = sbr.rel (0) target = $region5
    $region4: #{tpu_custom_call.1} parent=1 // pred_region
      _
    $region5: #{tpu_custom_call.1} parent=1 // pred_fallthru
      _
    // Predicated region
    $region6: #{tpu_custom_call.1} parent=1 // pred_check
      _
    $region7: #{tpu_custom_call.1} parent=1 // pred_check_branch
      %22 = sbr.rel (0) target = $region9
    $region8: #{tpu_custom_call.1} parent=1 // pred_region
      _
    $region9: #{tpu_custom_call.1} parent=1 // pred_fallthru
      _
    // Predicated region
    $region10: #{tpu_custom_call.1} parent=1 // pred_check
      _
    $region11: #{tpu_custom_call.1} parent=1 // pred_check_branch
      %24 = sbr.rel (0) target = $region13
    $region12: #{tpu_custom_call.1} parent=1 // pred_region
      _
    $region13: #{tpu_custom_call.1} parent=1 // pred_fallthru
      _
    // Predicated region
    $region14: #{tpu_custom_call.1} parent=1 // pred_check
      _
    $region15: #{tpu_custom_call.1} parent=1 // pred_check_branch
      %26 = sbr.rel (0) target = $region17
    $region16: #{tpu_custom_call.1} parent=1 // pred_region
      _
    $region17: #{tpu_custom_call.1} parent=1 // pred_fallthru
      _
    // Predicated region
    $region18: #{tpu_custom_call.1} parent=1 // pred_check
      _
    $region19: #{tpu_custom_call.1} parent=1 // pred_check_branch
      %28 = sbr.rel (0) target = $region21
    $region20: #{tpu_custom_call.1} parent=1 // pred_region
      _
    $region21: #{tpu_custom_call.1} parent=1 // pred_fallthru
      _
    // Predicated region
    $region22: #{tpu_custom_call.1} parent=1 // pred_check
      _
    $region23: #{tpu_custom_call.1} parent=1 // pred_check_branch
      %30 = sbr.rel (0) target = $region25
    $region24: #{tpu_custom_call.1} parent=1 // pred_region
      _
    $region25: #{tpu_custom_call.1} parent=1 // pred_fallthru
      _
    // Predicated region
    $region26: #{tpu_custom_call.1} parent=1 // pred_check
      _
    $region27: #{tpu_custom_call.1} parent=1 // pred_check_branch
      %32 = sbr.rel (0) target = $region29
    $region28: #{tpu_custom_call.1} parent=1 // pred_region
      _
    $region29: #{tpu_custom_call.1} parent=1 // pred_fallthru
      _
    // Predicated region
    $region30: #{tpu_custom_call.1} parent=1 // pred_check
      _
    $region31: #{tpu_custom_call.1} parent=1 // pred_check_branch
      %34 = sbr.rel (0) target = $region33
    $region32: #{tpu_custom_call.1} parent=1 // pred_region
      _
    $region33: #{tpu_custom_call.1} parent=1 // pred_fallthru
      _
    // Predicated region
    $region34: #{tpu_custom_call.1} parent=1 // pred_check
      _
    $region35: #{tpu_custom_call.1} parent=1 // pred_check_branch
      %36 = sbr.rel (0) target = $region37
    $region36: #{tpu_custom_call.1} parent=1 // pred_region
      _
    $region37: #{tpu_custom_call.1} parent=1 // pred_fallthru
      _
    // Predicated region
    $region38: #{tpu_custom_call.1} parent=1 // pred_check
      _
    $region39: #{tpu_custom_call.1} parent=1 // pred_check_branch
      %38 = sbr.rel (0) target = $region41
    $region40: #{tpu_custom_call.1} parent=1 // pred_region
      _
    $region41: #{tpu_custom_call.1} parent=1 // pred_fallthru
      _
    // Predicated region
    $region42: #{tpu_custom_call.1} parent=1 // pred_check
      _
    $region43: #{tpu_custom_call.1} parent=1 // pred_check_branch
      %40 = sbr.rel (0) target = $region45
    $region44: #{tpu_custom_call.1} parent=1 // pred_region
      _
    $region45: #{tpu_custom_call.1} parent=1 // pred_fallthru
      _
    %v42 = vld [vmem:[%s0] sm:$0xff]
    %v43 = vld [vmem:[%s0 + $0x8] sm:$0xff]
    %v44 = vld [vmem:[%s0 + $0x10] sm:$0xff]
    %v45 = vld [vmem:[%s0 + $0x18] sm:$0xff]
    %v46 = vld [vmem:[%s0 + $0x20] sm:$0xff]
    %v47 = vld [vmem:[%s0 + $0x28] sm:$0xff]
    %v48 = vld [vmem:[%s0 + $0x30] sm:$0xff]
    %v49 = vld [vmem:[%s0 + $0x38] sm:$0xff]
    %v50 = vld [vmem:[%s0 + $0x40] sm:$0xff]
    %v51 = vld [vmem:[%s0 + $0x48] sm:$0xff]
    %v52 = vld [vmem:[%s0 + $0x50] sm:$0xff]
    %v53 = vld [vmem:[%s0 + $0x58] sm:$0xff]
    %v54 = vld [vmem:[%s0 + $0x60] sm:$0xff]
    %v55 = vld [vmem:[%s0 + $0x68] sm:$0xff]
    %v56 = vld [vmem:[%s0 + $0x70] sm:$0xff]
    %v57 = vld [vmem:[%s0 + $0x78] sm:$0xff]
    %v58 = vld [vmem:[%s0 + $0x80] sm:$0xff]
    %v59 = vld [vmem:[%s0 + $0x88] sm:$0xff]
    %v60 = vld [vmem:[%s0 + $0x90] sm:$0xff]
    %v61 = vld [vmem:[%s0 + $0x98] sm:$0xff]
    %v62 = vld [vmem:[%s0 + $0xa0] sm:$0xff]
    %v63 = vld [vmem:[%s0 + $0xa8] sm:$0xff]
    %v64 = vld [vmem:[%s0 + $0xb0] sm:$0xff]
    %v65 = vld [vmem:[%s0 + $0xb8] sm:$0xff]
    %v66 = vld [vmem:[%s0 + $0xc0] sm:$0xff]
    %v67 = vld [vmem:[%s0 + $0xc8] sm:$0xff]
    %v68 = vld [vmem:[%s0 + $0xd0] sm:$0xff]
    %v69 = vld [vmem:[%s0 + $0xd8] sm:$0xff]
    %v70 = vld [vmem:[%s0 + $0xe0] sm:$0xff]
    %v71 = vld [vmem:[%s0 + $0xe8] sm:$0xff]
    %v72 = vld [vmem:[%s0 + $0xf0] sm:$0xff]
    %v73 = vld [vmem:[%s0 + $0xf8] sm:$0xff]
    %v74 = vpack.c.bf16 %v43, %v42
    %v75 = vpack.c.bf16 %v45, %v44
    %v76 = vpack.c.bf16 %v47, %v46
    %v77 = vpack.c.bf16 %v49, %v48
    %v78 = vpack.c.bf16 %v51, %v50
    %v79 = vpack.c.bf16 %v53, %v52
    %v80 = vpack.c.bf16 %v55, %v54
    %v81 = vpack.c.bf16 %v57, %v56
    %v82 = vpack.c.bf16 %v59, %v58
    %v83 = vpack.c.bf16 %v61, %v60
    %v84 = vpack.c.bf16 %v63, %v62
    %v85 = vpack.c.bf16 %v65, %v64
    %v86 = vpack.c.bf16 %v67, %v66
    %v87 = vpack.c.bf16 %v69, %v68
    %v88 = vpack.c.bf16 %v71, %v70
    %v89 = vpack.c.bf16 %v73, %v72
    %v90 = vld [vmem:[%s1] sm:$0xf]
    %v91 = vld [vmem:[%s1 + $0x4] sm:$0xf]
    %v92 = vld [vmem:[%s1 + $0x8] sm:$0xf]
    %v93 = vld [vmem:[%s1 + $0xc] sm:$0xf]
    %v94 = vld [vmem:[%s1 + $0x10] sm:$0xf]
    %v95 = vld [vmem:[%s1 + $0x14] sm:$0xf]
    %v96 = vld [vmem:[%s1 + $0x18] sm:$0xf]
    %v97 = vld [vmem:[%s1 + $0x1c] sm:$0xf]
    %v98 = vld [vmem:[%s1 + $0x20] sm:$0xf]
    %v99 = vld [vmem:[%s1 + $0x24] sm:$0xf]
    %v100 = vld [vmem:[%s1 + $0x28] sm:$0xf]
    %v101 = vld [vmem:[%s1 + $0x2c] sm:$0xf]
    %v102 = vld [vmem:[%s1 + $0x30] sm:$0xf]
    %v103 = vld [vmem:[%s1 + $0x34] sm:$0xf]
    %v104 = vld [vmem:[%s1 + $0x38] sm:$0xf]
    %v105 = vld [vmem:[%s1 + $0x3c] sm:$0xf]
    %v106 = vld [vmem:[%s1 + $0x40] sm:$0xf]
    %v107 = vld [vmem:[%s1 + $0x44] sm:$0xf]
    %v108 = vld [vmem:[%s1 + $0x48] sm:$0xf]
    %v109 = vld [vmem:[%s1 + $0x4c] sm:$0xf]
    %v110 = vld [vmem:[%s1 + $0x50] sm:$0xf]
    %v111 = vld [vmem:[%s1 + $0x54] sm:$0xf]
    %v112 = vld [vmem:[%s1 + $0x58] sm:$0xf]
    %v113 = vld [vmem:[%s1 + $0x5c] sm:$0xf]
    %v114 = vld [vmem:[%s1 + $0x60] sm:$0xf]
    %v115 = vld [vmem:[%s1 + $0x64] sm:$0xf]
    %v116 = vld [vmem:[%s1 + $0x68] sm:$0xf]
    %v117 = vld [vmem:[%s1 + $0x6c] sm:$0xf]
    %v118 = vld [vmem:[%s1 + $0x70] sm:$0xf]
    %v119 = vld [vmem:[%s1 + $0x74] sm:$0xf]
    %v120 = vld [vmem:[%s2] sm:$0xff]
    %v121 = vld [vmem:[%s2 + $0x8] sm:$0xff]
    %v122 = vld [vmem:[%s2 + $0x10] sm:$0xff]
    %v123 = vld [vmem:[%s2 + $0x18] sm:$0xff]
    %v124 = vld [vmem:[%s2 + $0x20] sm:$0xff]
    %v125 = vld [vmem:[%s2 + $0x28] sm:$0xff]
    %v126 = vld [vmem:[%s2 + $0x30] sm:$0xff]
    %v127 = vld [vmem:[%s2 + $0x38] sm:$0xff]
    %v128 = vld [vmem:[%s2 + $0x40] sm:$0xff]
    %v129 = vld [vmem:[%s2 + $0x48] sm:$0xff]
    %v130 = vld [vmem:[%s2 + $0x50] sm:$0xff]
    %v131 = vld [vmem:[%s2 + $0x58] sm:$0xff]
    %v132 = vld [vmem:[%s2 + $0x60] sm:$0xff]
    %v133 = vld [vmem:[%s2 + $0x68] sm:$0xff]
    %v134 = vld [vmem:[%s2 + $0x70] sm:$0xff]
    %v135 = vld [vmem:[%s2 + $0x78] sm:$0xff]
    %v136 = vld [vmem:[%s2 + $0x80] sm:$0xff]
    %v137 = vld [vmem:[%s2 + $0x88] sm:$0xff]
    %v138 = vld [vmem:[%s2 + $0x90] sm:$0xff]
    %v139 = vld [vmem:[%s2 + $0x98] sm:$0xff]
    %v140 = vld [vmem:[%s2 + $0xa0] sm:$0xff]
    %v141 = vld [vmem:[%s2 + $0xa8] sm:$0xff]
    %v142 = vld [vmem:[%s2 + $0xb0] sm:$0xff]
    %v143 = vld [vmem:[%s2 + $0xb8] sm:$0xff]
    %v144 = vld [vmem:[%s2 + $0xc0] sm:$0xff]
    %v145 = vld [vmem:[%s2 + $0xc8] sm:$0xff]
    %v146 = vld [vmem:[%s2 + $0xd0] sm:$0xff]
    %v147 = vld [vmem:[%s2 + $0xd8] sm:$0xff]
    %v148 = vld [vmem:[%s2 + $0xe0] sm:$0xff]
    %v149 = vld [vmem:[%s2 + $0xe8] sm:$0xff]
    %151 = vset.pattern.permute.xlu0 0
    %152 = vperm.xlu0 %151, %v120
    %v153 = vpop.permute.xlu0 %152
    %156 = vset.pattern.permute.xlu0 0
    %157 = vperm.xlu0 %156, %v121
    %v158 = vpop.permute.xlu0 %157
    %161 = vset.pattern.permute.xlu0 0
    %162 = vperm.xlu0 %161, %v122
    %v163 = vpop.permute.xlu0 %162
    %166 = vset.pattern.permute.xlu0 0
    %167 = vperm.xlu0 %166, %v123
    %v168 = vpop.permute.xlu0 %167
    %171 = vset.pattern.permute.xlu0 0
    %172 = vperm.xlu0 %171, %v124
    %v173 = vpop.permute.xlu0 %172
    %176 = vset.pattern.permute.xlu0 0
    %177 = vperm.xlu0 %176, %v125
    %v178 = vpop.permute.xlu0 %177
    %181 = vset.pattern.permute.xlu0 0
    %182 = vperm.xlu0 %181, %v126
    %v183 = vpop.permute.xlu0 %182
    %186 = vset.pattern.permute.xlu0 0
    %187 = vperm.xlu0 %186, %v127
    %v188 = vpop.permute.xlu0 %187
    %191 = vset.pattern.permute.xlu0 0
    %192 = vperm.xlu0 %191, %v128
    %v193 = vpop.permute.xlu0 %192
    %196 = vset.pattern.permute.xlu0 0
    %197 = vperm.xlu0 %196, %v129
    %v198 = vpop.permute.xlu0 %197
    %201 = vset.pattern.permute.xlu0 0
    %202 = vperm.xlu0 %201, %v130
    %v203 = vpop.permute.xlu0 %202
    %206 = vset.pattern.permute.xlu0 0
    %207 = vperm.xlu0 %206, %v131
    %v208 = vpop.permute.xlu0 %207
    %211 = vset.pattern.permute.xlu0 0
    %212 = vperm.xlu0 %211, %v132
    %v213 = vpop.permute.xlu0 %212
    %216 = vset.pattern.permute.xlu0 0
    %217 = vperm.xlu0 %216, %v133
    %v218 = vpop.permute.xlu0 %217
    %221 = vset.pattern.permute.xlu0 0
    %222 = vperm.xlu0 %221, %v134
    %v223 = vpop.permute.xlu0 %222
    %226 = vset.pattern.permute.xlu0 0
    %227 = vperm.xlu0 %226, %v135
    %v228 = vpop.permute.xlu0 %227
    %231 = vset.pattern.permute.xlu0 0
    %232 = vperm.xlu0 %231, %v136
    %v233 = vpop.permute.xlu0 %232
    %236 = vset.pattern.permute.xlu0 0
    %237 = vperm.xlu0 %236, %v137
    %v238 = vpop.permute.xlu0 %237
    %241 = vset.pattern.permute.xlu0 0
    %242 = vperm.xlu0 %241, %v138
    %v243 = vpop.permute.xlu0 %242
    %246 = vset.pattern.permute.xlu0 0
    %247 = vperm.xlu0 %246, %v139
    %v248 = vpop.permute.xlu0 %247
    %251 = vset.pattern.permute.xlu0 0
    %252 = vperm.xlu0 %251, %v140
    %v253 = vpop.permute.xlu0 %252
    %256 = vset.pattern.permute.xlu0 0
    %257 = vperm.xlu0 %256, %v141
    %v258 = vpop.permute.xlu0 %257
    %261 = vset.pattern.permute.xlu0 0
    %262 = vperm.xlu0 %261, %v142
    %v263 = vpop.permute.xlu0 %262
    %266 = vset.pattern.permute.xlu0 0
    %267 = vperm.xlu0 %266, %v143
    %v268 = vpop.permute.xlu0 %267
    %271 = vset.pattern.permute.xlu0 0
    %272 = vperm.xlu0 %271, %v144
    %v273 = vpop.permute.xlu0 %272
    %276 = vset.pattern.permute.xlu0 0
    %277 = vperm.xlu0 %276, %v145
    %v278 = vpop.permute.xlu0 %277
    %281 = vset.pattern.permute.xlu0 0
    %282 = vperm.xlu0 %281, %v146
    %v283 = vpop.permute.xlu0 %282
    %286 = vset.pattern.permute.xlu0 0
    %287 = vperm.xlu0 %286, %v147
    %v288 = vpop.permute.xlu0 %287
    %291 = vset.pattern.permute.xlu0 0
    %292 = vperm.xlu0 %291, %v148
    %v293 = vpop.permute.xlu0 %292
    %296 = vset.pattern.permute.xlu0 0
    %297 = vperm.xlu0 %296, %v149
    %v298 = vpop.permute.xlu0 %297
    %v330 = vunpack.c.l.b16 %v90
    %v331 = vunpack.c.l.b16 %v91
    %v332 = vunpack.c.l.b16 %v92
    %v333 = vunpack.c.l.b16 %v93
    %v334 = vunpack.c.l.b16 %v94
    %v335 = vunpack.c.l.b16 %v95
    %v336 = vunpack.c.l.b16 %v96
    %v337 = vunpack.c.l.b16 %v97
    %v338 = vunpack.c.l.b16 %v98
    %v339 = vunpack.c.l.b16 %v99
    %v340 = vunpack.c.l.b16 %v100
    %v341 = vunpack.c.l.b16 %v101
    %v342 = vunpack.c.l.b16 %v102
    %v343 = vunpack.c.l.b16 %v103
    %v344 = vunpack.c.l.b16 %v104
    %v345 = vunpack.c.l.b16 %v105
    %v346 = vunpack.c.l.b16 %v106
    %v347 = vunpack.c.l.b16 %v107
    %v348 = vunpack.c.l.b16 %v108
    %v349 = vunpack.c.l.b16 %v109
    %v350 = vunpack.c.l.b16 %v110
    %v351 = vunpack.c.l.b16 %v111
    %v352 = vunpack.c.l.b16 %v112
    %v353 = vunpack.c.l.b16 %v113
    %v354 = vunpack.c.l.b16 %v114
    %v355 = vunpack.c.l.b16 %v115
    %v356 = vunpack.c.l.b16 %v116
    %v357 = vunpack.c.l.b16 %v117
    %v358 = vunpack.c.l.b16 %v118
    %v359 = vunpack.c.l.b16 %v119
    %v360 = vpack.c.b16 %v331, %v330
    %v361 = vpack.c.b16 %v333, %v332
    %v362 = vpack.c.b16 %v335, %v334
    %v363 = vpack.c.b16 %v337, %v336
    %v364 = vpack.c.b16 %v339, %v338
    %v365 = vpack.c.b16 %v341, %v340
    %v366 = vpack.c.b16 %v343, %v342
    %v367 = vpack.c.b16 %v345, %v344
    %v368 = vpack.c.b16 %v347, %v346
    %v369 = vpack.c.b16 %v349, %v348
    %v370 = vpack.c.b16 %v351, %v350
    %v371 = vpack.c.b16 %v353, %v352
    %v372 = vpack.c.b16 %v355, %v354
    %v373 = vpack.c.b16 %v357, %v356
    %v374 = vpack.c.b16 %v359, %v358
    %vm375 = vcmask 408576
    %v377 = vsel %vm375, %v360, 0
    %v380 = vsel %vm375, %v361, 0
    %v383 = vsel %vm375, %v362, 0
    %v386 = vsel %vm375, %v363, 0
    %v389 = vsel %vm375, %v364, 0
    %v392 = vsel %vm375, %v365, 0
    %v395 = vsel %vm375, %v366, 0
    %v398 = vsel %vm375, %v367, 0
    %v401 = vsel %vm375, %v368, 0
    %v404 = vsel %vm375, %v369, 0
    %v407 = vsel %vm375, %v370, 0
    %v410 = vsel %vm375, %v371, 0
    %v413 = vsel %vm375, %v372, 0
    %v416 = vsel %vm375, %v373, 0
    %v419 = vsel %vm375, %v374, 0
    %v422 = vsel %vm375, %v74, 0
    %v425 = vsel %vm375, %v75, 0
    %v428 = vsel %vm375, %v76, 0
    %v431 = vsel %vm375, %v77, 0
    %v434 = vsel %vm375, %v78, 0
    %v437 = vsel %vm375, %v79, 0
    %v440 = vsel %vm375, %v80, 0
    %v443 = vsel %vm375, %v81, 0
    %v446 = vsel %vm375, %v82, 0
    %v449 = vsel %vm375, %v83, 0
    %v452 = vsel %vm375, %v84, 0
    %v455 = vsel %vm375, %v85, 0
    %v458 = vsel %vm375, %v86, 0
    %v461 = vsel %vm375, %v87, 0
    %v464 = vsel %vm375, %v88, 0
    %v467 = vsel %vm375, %v89, 0
    %469 = vmatprep.subr.bf16.mxu0 0
    %470 = vmatpush1.bf16.xpose.msra.mxu0 %v422
    %471 = vmatprep.subr.bf16.mxu0 0
    %472 = vmatpush1.bf16.xpose.msra.mxu0 %v425
    %473 = vmatprep.subr.bf16.mxu0 0
    %474 = vmatpush1.bf16.xpose.msra.mxu0 %v428
    %475 = vmatprep.subr.bf16.mxu0 0
    %476 = vmatpush1.bf16.xpose.msra.mxu0 %v431
    %477 = vmatprep.subr.bf16.mxu0 0
    %478 = vmatpush1.bf16.xpose.msra.mxu0 %v434
    %479 = vmatprep.subr.bf16.mxu0 0
    %480 = vmatpush1.bf16.xpose.msra.mxu0 %v437
    %481 = vmatprep.subr.bf16.mxu0 0
    %482 = vmatpush1.bf16.xpose.msra.mxu0 %v440
    %483 = vmatprep.subr.bf16.mxu0 0
    %484 = vmatpush1.bf16.xpose.msra.mxu0 %v443
    %485 = vmatprep.subr.bf16.mxu0 0
    %486 = vmatpush1.bf16.xpose.msra.mxu0 %v446
    %487 = vmatprep.subr.bf16.mxu0 0
    %488 = vmatpush1.bf16.xpose.msra.mxu0 %v449
    %489 = vmatprep.subr.bf16.mxu0 0
    %490 = vmatpush1.bf16.xpose.msra.mxu0 %v452
    %491 = vmatprep.subr.bf16.mxu0 0
    %492 = vmatpush1.bf16.xpose.msra.mxu0 %v455
    %493 = vmatprep.subr.bf16.mxu0 0
    %494 = vmatpush1.bf16.xpose.msra.mxu0 %v458
    %495 = vmatprep.subr.bf16.mxu0 0
    %496 = vmatpush1.bf16.xpose.msra.mxu0 %v461
    %497 = vmatprep.subr.bf16.mxu0 0
    %498 = vmatpush1.bf16.xpose.msra.mxu0 %v464
    %499 = vmatprep.subr.bf16.mxu0 0
    %500 = vmatpush1.bf16.xpose.msra.mxu0 %v467
    %501 = vmatprep.mubr.bf16.mxu0 0
    %502 = vmatmul.mubr.bf16.gmra.mrb[0].mxu0 %v377
    %v503 = vpop.f32.mrb[0].mxu0
    %v504 = vadd.f32 %v153, %v503
    %v505 = vpop.f32.mrb[0].mxu0
    %v506 = vadd.f32 %v153, %v505
    %v507 = vpop.f32.mrb[0].mxu0
    %v508 = vadd.f32 %v158, %v507
    %v509 = vpop.f32.mrb[0].mxu0
    %v510 = vadd.f32 %v158, %v509
    %511 = vmatprep.mubr.bf16.mxu0 0
    %512 = vmatmul.mubr.bf16.gmra.mrb[0].mxu0 %v380
    %v513 = vpop.f32.mrb[0].mxu0
    %v514 = vadd.f32 %v163, %v513
    %v515 = vpop.f32.mrb[0].mxu0
    %v516 = vadd.f32 %v163, %v515
    %v517 = vpop.f32.mrb[0].mxu0
    %v518 = vadd.f32 %v168, %v517
    %v519 = vpop.f32.mrb[0].mxu0
    %v520 = vadd.f32 %v168, %v519
    %521 = vmatprep.mubr.bf16.mxu0 0
    %522 = vmatmul.mubr.bf16.gmra.mrb[0].mxu0 %v383
    %v523 = vpop.f32.mrb[0].mxu0
    %v524 = vadd.f32 %v173, %v523
    %v525 = vpop.f32.mrb[0].mxu0
    %v526 = vadd.f32 %v173, %v525
    %v527 = vpop.f32.mrb[0].mxu0
    %v528 = vadd.f32 %v178, %v527
    %v529 = vpop.f32.mrb[0].mxu0
    %v530 = vadd.f32 %v178, %v529
    %531 = vmatprep.mubr.bf16.mxu0 0
    %532 = vmatmul.mubr.bf16.gmra.mrb[0].mxu0 %v386
    %v533 = vpop.f32.mrb[0].mxu0
    %v534 = vadd.f32 %v183, %v533
    %v535 = vpop.f32.mrb[0].mxu0
    %v536 = vadd.f32 %v183, %v535
    %v537 = vpop.f32.mrb[0].mxu0
    %v538 = vadd.f32 %v188, %v537
    %v539 = vpop.f32.mrb[0].mxu0
    %v540 = vadd.f32 %v188, %v539
    %541 = vmatprep.mubr.bf16.mxu0 0
    %542 = vmatmul.mubr.bf16.gmra.mrb[0].mxu0 %v389
    %v543 = vpop.f32.mrb[0].mxu0
    %v544 = vadd.f32 %v193, %v543
    %v545 = vpop.f32.mrb[0].mxu0
    %v546 = vadd.f32 %v193, %v545
    %v547 = vpop.f32.mrb[0].mxu0
    %v548 = vadd.f32 %v198, %v547
    %v549 = vpop.f32.mrb[0].mxu0
    %v550 = vadd.f32 %v198, %v549
    %551 = vmatprep.mubr.bf16.mxu0 0
    %552 = vmatmul.mubr.bf16.gmra.mrb[0].mxu0 %v392
    %v553 = vpop.f32.mrb[0].mxu0
    %v554 = vadd.f32 %v203, %v553
    %v555 = vpop.f32.mrb[0].mxu0
    %v556 = vadd.f32 %v203, %v555
    %v557 = vpop.f32.mrb[0].mxu0
    %v558 = vadd.f32 %v208, %v557
    %v559 = vpop.f32.mrb[0].mxu0
    %v560 = vadd.f32 %v208, %v559
    %561 = vmatprep.mubr.bf16.mxu0 0
    %562 = vmatmul.mubr.bf16.gmra.mrb[0].mxu0 %v395
    %v563 = vpop.f32.mrb[0].mxu0
    %v564 = vadd.f32 %v213, %v563
    %v565 = vpop.f32.mrb[0].mxu0
    %v566 = vadd.f32 %v213, %v565
    %v567 = vpop.f32.mrb[0].mxu0
    %v568 = vadd.f32 %v218, %v567
    %v569 = vpop.f32.mrb[0].mxu0
    %v570 = vadd.f32 %v218, %v569
    %571 = vmatprep.mubr.bf16.mxu0 0
    %572 = vmatmul.mubr.bf16.gmra.mrb[0].mxu0 %v398
    %v573 = vpop.f32.mrb[0].mxu0
    %v574 = vadd.f32 %v223, %v573
    %v575 = vpop.f32.mrb[0].mxu0
    %v576 = vadd.f32 %v223, %v575
    %v577 = vpop.f32.mrb[0].mxu0
    %v578 = vadd.f32 %v228, %v577
    %v579 = vpop.f32.mrb[0].mxu0
    %v580 = vadd.f32 %v228, %v579
    %581 = vmatprep.mubr.bf16.mxu0 0
    %582 = vmatmul.mubr.bf16.gmra.mrb[0].mxu0 %v401
    %v583 = vpop.f32.mrb[0].mxu0
    %v584 = vadd.f32 %v233, %v583
    %v585 = vpop.f32.mrb[0].mxu0
    %v586 = vadd.f32 %v233, %v585
    %v587 = vpop.f32.mrb[0].mxu0
    %v588 = vadd.f32 %v238, %v587
    %v589 = vpop.f32.mrb[0].mxu0
    %v590 = vadd.f32 %v238, %v589
    %591 = vmatprep.mubr.bf16.mxu0 0
    %592 = vmatmul.mubr.bf16.gmra.mrb[0].mxu0 %v404
    %v593 = vpop.f32.mrb[0].mxu0
    %v594 = vadd.f32 %v243, %v593
    %v595 = vpop.f32.mrb[0].mxu0
    %v596 = vadd.f32 %v243, %v595
    %v597 = vpop.f32.mrb[0].mxu0
    %v598 = vadd.f32 %v248, %v597
    %v599 = vpop.f32.mrb[0].mxu0
    %v600 = vadd.f32 %v248, %v599
    %601 = vmatprep.mubr.bf16.mxu0 0
    %602 = vmatmul.mubr.bf16.gmra.mrb[0].mxu0 %v407
    %v603 = vpop.f32.mrb[0].mxu0
    %v604 = vadd.f32 %v253, %v603
    %v605 = vpop.f32.mrb[0].mxu0
    %v606 = vadd.f32 %v253, %v605
    %v607 = vpop.f32.mrb[0].mxu0
    %v608 = vadd.f32 %v258, %v607
    %v609 = vpop.f32.mrb[0].mxu0
    %v610 = vadd.f32 %v258, %v609
    %611 = vmatprep.mubr.bf16.mxu0 0
    %612 = vmatmul.mubr.bf16.gmra.mrb[0].mxu0 %v410
    %v613 = vpop.f32.mrb[0].mxu0
    %v614 = vadd.f32 %v263, %v613
    %v615 = vpop.f32.mrb[0].mxu0
    %v616 = vadd.f32 %v263, %v615
    %v617 = vpop.f32.mrb[0].mxu0
    %v618 = vadd.f32 %v268, %v617
    %v619 = vpop.f32.mrb[0].mxu0
    %v620 = vadd.f32 %v268, %v619
    %621 = vmatprep.mubr.bf16.mxu0 0
    %622 = vmatmul.mubr.bf16.gmra.mrb[0].mxu0 %v413
    %v623 = vpop.f32.mrb[0].mxu0
    %v624 = vadd.f32 %v273, %v623
    %v625 = vpop.f32.mrb[0].mxu0
    %v626 = vadd.f32 %v273, %v625
    %v627 = vpop.f32.mrb[0].mxu0
    %v628 = vadd.f32 %v278, %v627
    %v629 = vpop.f32.mrb[0].mxu0
    %v630 = vadd.f32 %v278, %v629
    %631 = vmatprep.mubr.bf16.mxu0 0
    %632 = vmatmul.mubr.bf16.gmra.mrb[0].mxu0 %v416
    %v633 = vpop.f32.mrb[0].mxu0
    %v634 = vadd.f32 %v283, %v633
    %v635 = vpop.f32.mrb[0].mxu0
    %v636 = vadd.f32 %v283, %v635
    %v637 = vpop.f32.mrb[0].mxu0
    %v638 = vadd.f32 %v288, %v637
    %v639 = vpop.f32.mrb[0].mxu0
    %v640 = vadd.f32 %v288, %v639
    %641 = vmatprep.mubr.bf16.mxu0 0
    %642 = vmatmul.mubr.bf16.gmra.mrb[0].mxu0 %v419
    %v643 = vpop.f32.mrb[0].mxu0
    %v644 = vadd.f32 %v293, %v643
    %v645 = vpop.f32.mrb[0].mxu0
    %v646 = vadd.f32 %v293, %v645
    %v647 = vpop.f32.mrb[0].mxu0
    %v648 = vadd.f32 %v298, %v647
    %v649 = vpop.f32.mrb[0].mxu0
    %v650 = vadd.f32 %v298, %v649
    %651 = vdwg.mxu0
    %v652 = vmul.f32 %v504, 0.5
    %v653 = vmul.f32 %v506, 0.5
    %v654 = vmul.f32 %v508, 0.5
    %v655 = vmul.f32 %v510, 0.5
    %v656 = vmul.f32 %v514, 0.5
    %v657 = vmul.f32 %v516, 0.5
    %v658 = vmul.f32 %v518, 0.5
    %v659 = vmul.f32 %v520, 0.5
    %v660 = vmul.f32 %v524, 0.5
    %v661 = vmul.f32 %v526, 0.5
    %v662 = vmul.f32 %v528, 0.5
    %v663 = vmul.f32 %v530, 0.5
    %v664 = vmul.f32 %v534, 0.5
    %v665 = vmul.f32 %v536, 0.5
    %v666 = vmul.f32 %v538, 0.5
    %v667 = vmul.f32 %v540, 0.5
    %v668 = vmul.f32 %v544, 0.5
    %v669 = vmul.f32 %v546, 0.5
    %v670 = vmul.f32 %v548, 0.5
    %v671 = vmul.f32 %v550, 0.5
    %v672 = vmul.f32 %v554, 0.5
    %v673 = vmul.f32 %v556, 0.5
    %v674 = vmul.f32 %v558, 0.5
    %v675 = vmul.f32 %v560, 0.5
    %v676 = vmul.f32 %v564, 0.5
    %v677 = vmul.f32 %v566, 0.5
    %v678 = vmul.f32 %v568, 0.5
    %v679 = vmul.f32 %v570, 0.5
    %v680 = vmul.f32 %v574, 0.5
    %v681 = vmul.f32 %v576, 0.5
    %v682 = vmul.f32 %v578, 0.5
    %v683 = vmul.f32 %v580, 0.5
    %v684 = vmul.f32 %v584, 0.5
    %v685 = vmul.f32 %v586, 0.5
    %v686 = vmul.f32 %v588, 0.5
    %v687 = vmul.f32 %v590, 0.5
    %v688 = vmul.f32 %v594, 0.5
    %v689 = vmul.f32 %v596, 0.5
    %v690 = vmul.f32 %v598, 0.5
    %v691 = vmul.f32 %v600, 0.5
    %v692 = vmul.f32 %v604, 0.5
    %v693 = vmul.f32 %v606, 0.5
    %v694 = vmul.f32 %v608, 0.5
    %v695 = vmul.f32 %v610, 0.5
    %v696 = vmul.f32 %v614, 0.5
    %v697 = vmul.f32 %v616, 0.5
    %v698 = vmul.f32 %v618, 0.5
    %v699 = vmul.f32 %v620, 0.5
    %v700 = vmul.f32 %v624, 0.5
    %v701 = vmul.f32 %v626, 0.5
    %v702 = vmul.f32 %v628, 0.5
    %v703 = vmul.f32 %v630, 0.5
    %v704 = vmul.f32 %v634, 0.5
    %v705 = vmul.f32 %v636, 0.5
    %v706 = vmul.f32 %v638, 0.5
    %v707 = vmul.f32 %v640, 0.5
    %v708 = vmul.f32 %v644, 0.5
    %v709 = vmul.f32 %v646, 0.5
    %v710 = vmul.f32 %v648, 0.5
    %v711 = vmul.f32 %v650, 0.5
    %v712 = vtanh.pop %v652
    %v713 = vtanh.pop %v653
    %v714 = vtanh.pop %v654
    %v715 = vtanh.pop %v655
    %v716 = vtanh.pop %v656
    %v717 = vtanh.pop %v657
    %v718 = vtanh.pop %v658
    %v719 = vtanh.pop %v659
    %v720 = vtanh.pop %v660
    %v721 = vtanh.pop %v661
    %v722 = vtanh.pop %v662
    %v723 = vtanh.pop %v663
    %v724 = vtanh.pop %v664
    %v725 = vtanh.pop %v665
    %v726 = vtanh.pop %v666
    %v727 = vtanh.pop %v667
    %v728 = vtanh.pop %v668
    %v729 = vtanh.pop %v669
    %v730 = vtanh.pop %v670
    %v731 = vtanh.pop %v671
    %v732 = vtanh.pop %v672
    %v733 = vtanh.pop %v673
    %v734 = vtanh.pop %v674
    %v735 = vtanh.pop %v675
    %v736 = vtanh.pop %v676
    %v737 = vtanh.pop %v677
    %v738 = vtanh.pop %v678
    %v739 = vtanh.pop %v679
    %v740 = vtanh.pop %v680
    %v741 = vtanh.pop %v681
    %v742 = vtanh.pop %v682
    %v743 = vtanh.pop %v683
    %v744 = vtanh.pop %v684
    %v745 = vtanh.pop %v685
    %v746 = vtanh.pop %v686
    %v747 = vtanh.pop %v687
    %v748 = vtanh.pop %v688
    %v749 = vtanh.pop %v689
    %v750 = vtanh.pop %v690
    %v751 = vtanh.pop %v691
    %v752 = vtanh.pop %v692
    %v753 = vtanh.pop %v693
    %v754 = vtanh.pop %v694
    %v755 = vtanh.pop %v695
    %v756 = vtanh.pop %v696
    %v757 = vtanh.pop %v697
    %v758 = vtanh.pop %v698
    %v759 = vtanh.pop %v699
    %v760 = vtanh.pop %v700
    %v761 = vtanh.pop %v701
    %v762 = vtanh.pop %v702
    %v763 = vtanh.pop %v703
    %v764 = vtanh.pop %v704
    %v765 = vtanh.pop %v705
    %v766 = vtanh.pop %v706
    %v767 = vtanh.pop %v707
    %v768 = vtanh.pop %v708
    %v769 = vtanh.pop %v709
    %v770 = vtanh.pop %v710
    %v771 = vtanh.pop %v711
    %v772 = vmul.f32 %v712, 0.5
    %v773 = vmul.f32 %v713, 0.5
    %v774 = vmul.f32 %v714, 0.5
    %v775 = vmul.f32 %v715, 0.5
    %v776 = vmul.f32 %v716, 0.5
    %v777 = vmul.f32 %v717, 0.5
    %v778 = vmul.f32 %v718, 0.5
    %v779 = vmul.f32 %v719, 0.5
    %v780 = vmul.f32 %v720, 0.5
    %v781 = vmul.f32 %v721, 0.5
    %v782 = vmul.f32 %v722, 0.5
    %v783 = vmul.f32 %v723, 0.5
    %v784 = vmul.f32 %v724, 0.5
    %v785 = vmul.f32 %v725, 0.5
    %v786 = vmul.f32 %v726, 0.5
    %v787 = vmul.f32 %v727, 0.5
    %v788 = vmul.f32 %v728, 0.5
    %v789 = vmul.f32 %v729, 0.5
    %v790 = vmul.f32 %v730, 0.5
    %v791 = vmul.f32 %v731, 0.5
    %v792 = vmul.f32 %v732, 0.5
    %v793 = vmul.f32 %v733, 0.5
    %v794 = vmul.f32 %v734, 0.5
    %v795 = vmul.f32 %v735, 0.5
    %v796 = vmul.f32 %v736, 0.5
    %v797 = vmul.f32 %v737, 0.5
    %v798 = vmul.f32 %v738, 0.5
    %v799 = vmul.f32 %v739, 0.5
    %v800 = vmul.f32 %v740, 0.5
    %v801 = vmul.f32 %v741, 0.5
    %v802 = vmul.f32 %v742, 0.5
    %v803 = vmul.f32 %v743, 0.5
    %v804 = vmul.f32 %v744, 0.5
    %v805 = vmul.f32 %v745, 0.5
    %v806 = vmul.f32 %v746, 0.5
    %v807 = vmul.f32 %v747, 0.5
    %v808 = vmul.f32 %v748, 0.5
    %v809 = vmul.f32 %v749, 0.5
    %v810 = vmul.f32 %v750, 0.5
    %v811 = vmul.f32 %v751, 0.5
    %v812 = vmul.f32 %v752, 0.5
    %v813 = vmul.f32 %v753, 0.5
    %v814 = vmul.f32 %v754, 0.5
    %v815 = vmul.f32 %v755, 0.5
    %v816 = vmul.f32 %v756, 0.5
    %v817 = vmul.f32 %v757, 0.5
    %v818 = vmul.f32 %v758, 0.5
    %v819 = vmul.f32 %v759, 0.5
    %v820 = vmul.f32 %v760, 0.5
    %v821 = vmul.f32 %v761, 0.5
    %v822 = vmul.f32 %v762, 0.5
    %v823 = vmul.f32 %v763, 0.5
    %v824 = vmul.f32 %v764, 0.5
    %v825 = vmul.f32 %v765, 0.5
    %v826 = vmul.f32 %v766, 0.5
    %v827 = vmul.f32 %v767, 0.5
    %v828 = vmul.f32 %v768, 0.5
    %v829 = vmul.f32 %v769, 0.5
    %v830 = vmul.f32 %v770, 0.5
    %v831 = vmul.f32 %v771, 0.5
    %v832 = vadd.f32 %v772, 0.5
    %v833 = vadd.f32 %v773, 0.5
    %v834 = vadd.f32 %v774, 0.5
    %v835 = vadd.f32 %v775, 0.5
    %v836 = vadd.f32 %v776, 0.5
    %v837 = vadd.f32 %v777, 0.5
    %v838 = vadd.f32 %v778, 0.5
    %v839 = vadd.f32 %v779, 0.5
    %v840 = vadd.f32 %v780, 0.5
    %v841 = vadd.f32 %v781, 0.5
    %v842 = vadd.f32 %v782, 0.5
    %v843 = vadd.f32 %v783, 0.5
    %v844 = vadd.f32 %v784, 0.5
    %v845 = vadd.f32 %v785, 0.5
    %v846 = vadd.f32 %v786, 0.5
    %v847 = vadd.f32 %v787, 0.5
    %v848 = vadd.f32 %v788, 0.5
    %v849 = vadd.f32 %v789, 0.5
    %v850 = vadd.f32 %v790, 0.5
    %v851 = vadd.f32 %v791, 0.5
    %v852 = vadd.f32 %v792, 0.5
    %v853 = vadd.f32 %v793, 0.5
    %v854 = vadd.f32 %v794, 0.5
    %v855 = vadd.f32 %v795, 0.5
    %v856 = vadd.f32 %v796, 0.5
    %v857 = vadd.f32 %v797, 0.5
    %v858 = vadd.f32 %v798, 0.5
    %v859 = vadd.f32 %v799, 0.5
    %v860 = vadd.f32 %v800, 0.5
    %v861 = vadd.f32 %v801, 0.5
    %v862 = vadd.f32 %v802, 0.5
    %v863 = vadd.f32 %v803, 0.5
    %v864 = vadd.f32 %v804, 0.5
    %v865 = vadd.f32 %v805, 0.5
    %v866 = vadd.f32 %v806, 0.5
    %v867 = vadd.f32 %v807, 0.5
    %v868 = vadd.f32 %v808, 0.5
    %v869 = vadd.f32 %v809, 0.5
    %v870 = vadd.f32 %v810, 0.5
    %v871 = vadd.f32 %v811, 0.5
    %v872 = vadd.f32 %v812, 0.5
    %v873 = vadd.f32 %v813, 0.5
    %v874 = vadd.f32 %v814, 0.5
    %v875 = vadd.f32 %v815, 0.5
    %v876 = vadd.f32 %v816, 0.5
    %v877 = vadd.f32 %v817, 0.5
    %v878 = vadd.f32 %v818, 0.5
    %v879 = vadd.f32 %v819, 0.5
    %v880 = vadd.f32 %v820, 0.5
    %v881 = vadd.f32 %v821, 0.5
    %v882 = vadd.f32 %v822, 0.5
    %v883 = vadd.f32 %v823, 0.5
    %v884 = vadd.f32 %v824, 0.5
    %v885 = vadd.f32 %v825, 0.5
    %v886 = vadd.f32 %v826, 0.5
    %v887 = vadd.f32 %v827, 0.5
    %v888 = vadd.f32 %v828, 0.5
    %v889 = vadd.f32 %v829, 0.5
    %v890 = vadd.f32 %v830, 0.5
    %v891 = vadd.f32 %v831, 0.5
    %v892 = vmul.f32 %v504, %v832
    %v893 = vmul.f32 %v506, %v833
    %v894 = vmul.f32 %v508, %v834
    %v895 = vmul.f32 %v510, %v835
    %v896 = vmul.f32 %v514, %v836
    %v897 = vmul.f32 %v516, %v837
    %v898 = vmul.f32 %v518, %v838
    %v899 = vmul.f32 %v520, %v839
    %v900 = vmul.f32 %v524, %v840
    %v901 = vmul.f32 %v526, %v841
    %v902 = vmul.f32 %v528, %v842
    %v903 = vmul.f32 %v530, %v843
    %v904 = vmul.f32 %v534, %v844
    %v905 = vmul.f32 %v536, %v845
    %v906 = vmul.f32 %v538, %v846
    %v907 = vmul.f32 %v540, %v847
    %v908 = vmul.f32 %v544, %v848
    %v909 = vmul.f32 %v546, %v849
    %v910 = vmul.f32 %v548, %v850
    %v911 = vmul.f32 %v550, %v851
    %v912 = vmul.f32 %v554, %v852
    %v913 = vmul.f32 %v556, %v853
    %v914 = vmul.f32 %v558, %v854
    %v915 = vmul.f32 %v560, %v855
    %v916 = vmul.f32 %v564, %v856
    %v917 = vmul.f32 %v566, %v857
    %v918 = vmul.f32 %v568, %v858
    %v919 = vmul.f32 %v570, %v859
    %v920 = vmul.f32 %v574, %v860
    %v921 = vmul.f32 %v576, %v861
    %v922 = vmul.f32 %v578, %v862
    %v923 = vmul.f32 %v580, %v863
    %v924 = vmul.f32 %v584, %v864
    %v925 = vmul.f32 %v586, %v865
    %v926 = vmul.f32 %v588, %v866
    %v927 = vmul.f32 %v590, %v867
    %v928 = vmul.f32 %v594, %v868
    %v929 = vmul.f32 %v596, %v869
    %v930 = vmul.f32 %v598, %v870
    %v931 = vmul.f32 %v600, %v871
    %v932 = vmul.f32 %v604, %v872
    %v933 = vmul.f32 %v606, %v873
    %v934 = vmul.f32 %v608, %v874
    %v935 = vmul.f32 %v610, %v875
    %v936 = vmul.f32 %v614, %v876
    %v937 = vmul.f32 %v616, %v877
    %v938 = vmul.f32 %v618, %v878
    %v939 = vmul.f32 %v620, %v879
    %v940 = vmul.f32 %v624, %v880
    %v941 = vmul.f32 %v626, %v881
    %v942 = vmul.f32 %v628, %v882
    %v943 = vmul.f32 %v630, %v883
    %v944 = vmul.f32 %v634, %v884
    %v945 = vmul.f32 %v636, %v885
    %v946 = vmul.f32 %v638, %v886
    %v947 = vmul.f32 %v640, %v887
    %v948 = vmul.f32 %v644, %v888
    %v949 = vmul.f32 %v646, %v889
    %v950 = vmul.f32 %v648, %v890
    %v951 = vmul.f32 %v650, %v891
    %v952 = vpack.c.bf16 %v894, %v892
    %v953 = vpack.c.bf16 %v895, %v893
    %v954 = vpack.c.bf16 %v898, %v896
    %v955 = vpack.c.bf16 %v899, %v897
    %v956 = vpack.c.bf16 %v902, %v900
    %v957 = vpack.c.bf16 %v903, %v901
    %v958 = vpack.c.bf16 %v906, %v904
    %v959 = vpack.c.bf16 %v907, %v905
    %v960 = vpack.c.bf16 %v910, %v908
    %v961 = vpack.c.bf16 %v911, %v909
    %v962 = vpack.c.bf16 %v914, %v912
    %v963 = vpack.c.bf16 %v915, %v913
    %v964 = vpack.c.bf16 %v918, %v916
    %v965 = vpack.c.bf16 %v919, %v917
    %v966 = vpack.c.bf16 %v922, %v920
    %v967 = vpack.c.bf16 %v923, %v921
    %v968 = vpack.c.bf16 %v926, %v924
    %v969 = vpack.c.bf16 %v927, %v925
    %v970 = vpack.c.bf16 %v930, %v928
    %v971 = vpack.c.bf16 %v931, %v929
    %v972 = vpack.c.bf16 %v934, %v932
    %v973 = vpack.c.bf16 %v935, %v933
    %v974 = vpack.c.bf16 %v938, %v936
    %v975 = vpack.c.bf16 %v939, %v937
    %v976 = vpack.c.bf16 %v942, %v940
    %v977 = vpack.c.bf16 %v943, %v941
    %v978 = vpack.c.bf16 %v946, %v944
    %v979 = vpack.c.bf16 %v947, %v945
    %v980 = vpack.c.bf16 %v950, %v948
    %v981 = vpack.c.bf16 %v951, %v949
    %v982 = vld [vmem:[%s3] sm:$0xff]
    %v983 = vld [vmem:[%s3 + $0x8] sm:$0xff]
    %v984 = vld [vmem:[%s3 + $0x10] sm:$0xff]
    %v985 = vld [vmem:[%s3 + $0x18] sm:$0xff]
    %v986 = vld [vmem:[%s3 + $0x20] sm:$0xff]
    %v987 = vld [vmem:[%s3 + $0x28] sm:$0xff]
    %v988 = vld [vmem:[%s3 + $0x30] sm:$0xff]
    %v989 = vld [vmem:[%s3 + $0x38] sm:$0xff]
    %v990 = vld [vmem:[%s3 + $0x40] sm:$0xff]
    %v991 = vld [vmem:[%s3 + $0x48] sm:$0xff]
    %v992 = vld [vmem:[%s3 + $0x50] sm:$0xff]
    %v993 = vld [vmem:[%s3 + $0x58] sm:$0xff]
    %v994 = vld [vmem:[%s3 + $0x60] sm:$0xff]
    %v995 = vld [vmem:[%s3 + $0x68] sm:$0xff]
    %v996 = vld [vmem:[%s3 + $0x70] sm:$0xff]
    %v997 = vld [vmem:[%s3 + $0x78] sm:$0xff]
    %v998 = vld [vmem:[%s4] sm:$0xff]
    %v999 = vld [vmem:[%s4 + $0x8] sm:$0xff]
    %v1000 = vld [vmem:[%s4 + $0x10] sm:$0xff]
    %v1001 = vld [vmem:[%s4 + $0x18] sm:$0xff]
    %v1002 = vld [vmem:[%s4 + $0x20] sm:$0xff]
    %v1003 = vld [vmem:[%s4 + $0x28] sm:$0xff]
    %v1004 = vld [vmem:[%s4 + $0x30] sm:$0xff]
    %v1005 = vld [vmem:[%s4 + $0x38] sm:$0xff]
    %v1006 = vld [vmem:[%s4 + $0x40] sm:$0xff]
    %v1007 = vld [vmem:[%s4 + $0x48] sm:$0xff]
    %v1008 = vld [vmem:[%s4 + $0x50] sm:$0xff]
    %v1009 = vld [vmem:[%s4 + $0x58] sm:$0xff]
    %v1010 = vld [vmem:[%s4 + $0x60] sm:$0xff]
    %v1011 = vld [vmem:[%s4 + $0x68] sm:$0xff]
    %v1012 = vld [vmem:[%s4 + $0x70] sm:$0xff]
    %v1013 = vld [vmem:[%s4 + $0x78] sm:$0xff]
    %1015 = vset.pattern.permute.xlu0 0
    %1016 = vperm.xlu0 %1015, %v998
    %v1017 = vpop.permute.xlu0 %1016
    %1020 = vset.pattern.permute.xlu0 0
    %1021 = vperm.xlu0 %1020, %v999
    %v1022 = vpop.permute.xlu0 %1021
    %1025 = vset.pattern.permute.xlu0 0
    %1026 = vperm.xlu0 %1025, %v1000
    %v1027 = vpop.permute.xlu0 %1026
    %1030 = vset.pattern.permute.xlu0 0
    %1031 = vperm.xlu0 %1030, %v1001
    %v1032 = vpop.permute.xlu0 %1031
    %1035 = vset.pattern.permute.xlu0 0
    %1036 = vperm.xlu0 %1035, %v1002
    %v1037 = vpop.permute.xlu0 %1036
    %1040 = vset.pattern.permute.xlu0 0
    %1041 = vperm.xlu0 %1040, %v1003
    %v1042 = vpop.permute.xlu0 %1041
    %1045 = vset.pattern.permute.xlu0 0
    %1046 = vperm.xlu0 %1045, %v1004
    %v1047 = vpop.permute.xlu0 %1046
    %1050 = vset.pattern.permute.xlu0 0
    %1051 = vperm.xlu0 %1050, %v1005
    %v1052 = vpop.permute.xlu0 %1051
    %1055 = vset.pattern.permute.xlu0 0
    %1056 = vperm.xlu0 %1055, %v1006
    %v1057 = vpop.permute.xlu0 %1056
    %1060 = vset.pattern.permute.xlu0 0
    %1061 = vperm.xlu0 %1060, %v1007
    %v1062 = vpop.permute.xlu0 %1061
    %1065 = vset.pattern.permute.xlu0 0
    %1066 = vperm.xlu0 %1065, %v1008
    %v1067 = vpop.permute.xlu0 %1066
    %1070 = vset.pattern.permute.xlu0 0
    %1071 = vperm.xlu0 %1070, %v1009
    %v1072 = vpop.permute.xlu0 %1071
    %1075 = vset.pattern.permute.xlu0 0
    %1076 = vperm.xlu0 %1075, %v1010
    %v1077 = vpop.permute.xlu0 %1076
    %1080 = vset.pattern.permute.xlu0 0
    %1081 = vperm.xlu0 %1080, %v1011
    %v1082 = vpop.permute.xlu0 %1081
    %1085 = vset.pattern.permute.xlu0 0
    %1086 = vperm.xlu0 %1085, %v1012
    %v1087 = vpop.permute.xlu0 %1086
    %1090 = vset.pattern.permute.xlu0 0
    %1091 = vperm.xlu0 %1090, %v1013
    %v1092 = vpop.permute.xlu0 %1091
    %v1110 = vunpack.c.l.b16 %v982
    %v1111 = vunpack.c.h.b16 %v982
    %v1112 = vunpack.c.l.b16 %v983
    %v1113 = vunpack.c.h.b16 %v983
    %v1114 = vunpack.c.l.b16 %v984
    %v1115 = vunpack.c.h.b16 %v984
    %v1116 = vunpack.c.l.b16 %v985
    %v1117 = vunpack.c.h.b16 %v985
    %v1118 = vunpack.c.l.b16 %v986
    %v1119 = vunpack.c.h.b16 %v986
    %v1120 = vunpack.c.l.b16 %v987
    %v1121 = vunpack.c.h.b16 %v987
    %v1122 = vunpack.c.l.b16 %v988
    %v1123 = vunpack.c.h.b16 %v988
    %v1124 = vunpack.c.l.b16 %v989
    %v1125 = vunpack.c.h.b16 %v989
    %v1126 = vunpack.c.l.b16 %v990
    %v1127 = vunpack.c.h.b16 %v990
    %v1128 = vunpack.c.l.b16 %v991
    %v1129 = vunpack.c.h.b16 %v991
    %v1130 = vunpack.c.l.b16 %v992
    %v1131 = vunpack.c.h.b16 %v992
    %v1132 = vunpack.c.l.b16 %v993
    %v1133 = vunpack.c.h.b16 %v993
    %v1134 = vunpack.c.l.b16 %v994
    %v1135 = vunpack.c.h.b16 %v994
    %v1136 = vunpack.c.l.b16 %v995
    %v1137 = vunpack.c.h.b16 %v995
    %v1138 = vunpack.c.l.b16 %v996
    %v1139 = vunpack.c.h.b16 %v996
    %v1140 = vunpack.c.l.b16 %v997
    %v1141 = vunpack.c.h.b16 %v997
    %v1142 = vpack.c.b16 %v1112, %v1110
    %v1143 = vpack.c.b16 %v1113, %v1111
    %v1144 = vpack.c.b16 %v1116, %v1114
    %v1145 = vpack.c.b16 %v1117, %v1115
    %v1146 = vpack.c.b16 %v1120, %v1118
    %v1147 = vpack.c.b16 %v1121, %v1119
    %v1148 = vpack.c.b16 %v1124, %v1122
    %v1149 = vpack.c.b16 %v1125, %v1123
    %v1150 = vpack.c.b16 %v1128, %v1126
    %v1151 = vpack.c.b16 %v1129, %v1127
    %v1152 = vpack.c.b16 %v1132, %v1130
    %v1153 = vpack.c.b16 %v1133, %v1131
    %v1154 = vpack.c.b16 %v1136, %v1134
    %v1155 = vpack.c.b16 %v1137, %v1135
    %v1156 = vpack.c.b16 %v1140, %v1138
    %v1157 = vpack.c.b16 %v1141, %v1139
    %vm1166 = vcmask 916480
    %v1168 = vsel %vm1166, %v1143, 0
    %v1171 = vsel %vm1166, %v1145, 0
    %v1174 = vsel %vm1166, %v1147, 0
    %v1177 = vsel %vm1166, %v1149, 0
    %v1180 = vsel %vm1166, %v1151, 0
    %v1183 = vsel %vm1166, %v1153, 0
    %v1186 = vsel %vm1166, %v1155, 0
    %v1189 = vsel %vm1166, %v1157, 0
    %1191 = vmatprep.subr.bf16.mxu0 %v953
    %1192 = vmatpush1.bf16.msra.mxu0 %v952
    %1193 = vmatprep.subr.bf16.mxu0 %v955
    %1194 = vmatpush1.bf16.msra.mxu0 %v954
    %1195 = vmatprep.subr.bf16.mxu0 %v957
    %1196 = vmatpush1.bf16.msra.mxu0 %v956
    %1197 = vmatprep.subr.bf16.mxu0 %v959
    %1198 = vmatpush1.bf16.msra.mxu0 %v958
    %1199 = vmatprep.subr.bf16.mxu0 %v961
    %1200 = vmatpush1.bf16.msra.mxu0 %v960
    %1201 = vmatprep.subr.bf16.mxu0 %v963
    %1202 = vmatpush1.bf16.msra.mxu0 %v962
    %1203 = vmatprep.subr.bf16.mxu0 %v965
    %1204 = vmatpush1.bf16.msra.mxu0 %v964
    %1205 = vmatprep.subr.bf16.mxu0 %v967
    %1206 = vmatpush1.bf16.msra.mxu0 %v966
    %1207 = vmatprep.subr.bf16.mxu0 %v969
    %1208 = vmatpush1.bf16.msra.mxu0 %v968
    %1209 = vmatprep.subr.bf16.mxu0 %v971
    %1210 = vmatpush1.bf16.msra.mxu0 %v970
    %1211 = vmatprep.subr.bf16.mxu0 %v973
    %1212 = vmatpush1.bf16.msra.mxu0 %v972
    %1213 = vmatprep.subr.bf16.mxu0 %v975
    %1214 = vmatpush1.bf16.msra.mxu0 %v974
    %1215 = vmatprep.subr.bf16.mxu0 %v977
    %1216 = vmatpush1.bf16.msra.mxu0 %v976
    %1217 = vmatprep.subr.bf16.mxu0 %v979
    %1218 = vmatpush1.bf16.msra.mxu0 %v978
    %1219 = vmatprep.subr.bf16.mxu0 %v981
    %1220 = vmatpush1.bf16.msra.mxu0 %v980
    %1221 = vmatprep.subr.bf16.mxu0 0
    %1222 = vmatpush1.bf16.msra.mxu0 0
    %1223 = vmatprep.mubr.bf16.mxu0 %v1168
    %1224 = vmatmul.mubr.bf16.gmra.mrb[0].mxu0 %v1142
    %v1225 = vpop.f32.mrb[0].mxu0
    %v1226 = vadd.f32 %v1017, %v1225
    %v1227 = vpop.f32.mrb[0].mxu0
    %v1228 = vadd.f32 %v1017, %v1227
    %v1229 = vpop.f32.mrb[0].mxu0
    %v1230 = vadd.f32 %v1022, %v1229
    %v1231 = vpop.f32.mrb[0].mxu0
    %v1232 = vadd.f32 %v1022, %v1231
    %1233 = vmatprep.mubr.bf16.mxu0 %v1171
    %1234 = vmatmul.mubr.bf16.gmra.mrb[0].mxu0 %v1144
    %v1235 = vpop.f32.mrb[0].mxu0
    %v1236 = vadd.f32 %v1027, %v1235
    %v1237 = vpop.f32.mrb[0].mxu0
    %v1238 = vadd.f32 %v1027, %v1237
    %v1239 = vpop.f32.mrb[0].mxu0
    %v1240 = vadd.f32 %v1032, %v1239
    %v1241 = vpop.f32.mrb[0].mxu0
    %v1242 = vadd.f32 %v1032, %v1241
    %1243 = vmatprep.mubr.bf16.mxu0 %v1174
    %1244 = vmatmul.mubr.bf16.gmra.mrb[0].mxu0 %v1146
    %v1245 = vpop.f32.mrb[0].mxu0
    %v1246 = vadd.f32 %v1037, %v1245
    %v1247 = vpop.f32.mrb[0].mxu0
    %v1248 = vadd.f32 %v1037, %v1247
    %v1249 = vpop.f32.mrb[0].mxu0
    %v1250 = vadd.f32 %v1042, %v1249
    %v1251 = vpop.f32.mrb[0].mxu0
    %v1252 = vadd.f32 %v1042, %v1251
    %1253 = vmatprep.mubr.bf16.mxu0 %v1177
    %1254 = vmatmul.mubr.bf16.gmra.mrb[0].mxu0 %v1148
    %v1255 = vpop.f32.mrb[0].mxu0
    %v1256 = vadd.f32 %v1047, %v1255
    %v1257 = vpop.f32.mrb[0].mxu0
    %v1258 = vadd.f32 %v1047, %v1257
    %v1259 = vpop.f32.mrb[0].mxu0
    %v1260 = vadd.f32 %v1052, %v1259
    %v1261 = vpop.f32.mrb[0].mxu0
    %v1262 = vadd.f32 %v1052, %v1261
    %1263 = vmatprep.mubr.bf16.mxu0 %v1180
    %1264 = vmatmul.mubr.bf16.gmra.mrb[0].mxu0 %v1150
    %v1265 = vpop.f32.mrb[0].mxu0
    %v1266 = vadd.f32 %v1057, %v1265
    %v1267 = vpop.f32.mrb[0].mxu0
    %v1268 = vadd.f32 %v1057, %v1267
    %v1269 = vpop.f32.mrb[0].mxu0
    %v1270 = vadd.f32 %v1062, %v1269
    %v1271 = vpop.f32.mrb[0].mxu0
    %v1272 = vadd.f32 %v1062, %v1271
    %1273 = vmatprep.mubr.bf16.mxu0 %v1183
    %1274 = vmatmul.mubr.bf16.gmra.mrb[0].mxu0 %v1152
    %v1275 = vpop.f32.mrb[0].mxu0
    %v1276 = vadd.f32 %v1067, %v1275
    %v1277 = vpop.f32.mrb[0].mxu0
    %v1278 = vadd.f32 %v1067, %v1277
    %v1279 = vpop.f32.mrb[0].mxu0
    %v1280 = vadd.f32 %v1072, %v1279
    %v1281 = vpop.f32.mrb[0].mxu0
    %v1282 = vadd.f32 %v1072, %v1281
    %1283 = vmatprep.mubr.bf16.mxu0 %v1186
    %1284 = vmatmul.mubr.bf16.gmra.mrb[0].mxu0 %v1154
    %v1285 = vpop.f32.mrb[0].mxu0
    %v1286 = vadd.f32 %v1077, %v1285
    %v1287 = vpop.f32.mrb[0].mxu0
    %v1288 = vadd.f32 %v1077, %v1287
    %v1289 = vpop.f32.mrb[0].mxu0
    %v1290 = vadd.f32 %v1082, %v1289
    %v1291 = vpop.f32.mrb[0].mxu0
    %v1292 = vadd.f32 %v1082, %v1291
    %1293 = vmatprep.mubr.bf16.mxu0 %v1189
    %1294 = vmatmul.mubr.bf16.gmra.mrb[0].mxu0 %v1156
    %v1295 = vpop.f32.mrb[0].mxu0
    %v1296 = vadd.f32 %v1087, %v1295
    %v1297 = vpop.f32.mrb[0].mxu0
    %v1298 = vadd.f32 %v1087, %v1297
    %v1299 = vpop.f32.mrb[0].mxu0
    %v1300 = vadd.f32 %v1092, %v1299
    %v1301 = vpop.f32.mrb[0].mxu0
    %v1302 = vadd.f32 %v1092, %v1301
    %1303 = vdwg.mxu0
    %v1304 = vmul.f32 %v1226, 0.5
    %v1305 = vmul.f32 %v1228, 0.5
    %v1306 = vmul.f32 %v1230, 0.5
    %v1307 = vmul.f32 %v1232, 0.5
    %v1308 = vmul.f32 %v1236, 0.5
    %v1309 = vmul.f32 %v1238, 0.5
    %v1310 = vmul.f32 %v1240, 0.5
    %v1311 = vmul.f32 %v1242, 0.5
    %v1312 = vmul.f32 %v1246, 0.5
    %v1313 = vmul.f32 %v1248, 0.5
    %v1314 = vmul.f32 %v1250, 0.5
    %v1315 = vmul.f32 %v1252, 0.5
    %v1316 = vmul.f32 %v1256, 0.5
    %v1317 = vmul.f32 %v1258, 0.5
    %v1318 = vmul.f32 %v1260, 0.5
    %v1319 = vmul.f32 %v1262, 0.5
    %v1320 = vmul.f32 %v1266, 0.5
    %v1321 = vmul.f32 %v1268, 0.5
    %v1322 = vmul.f32 %v1270, 0.5
    %v1323 = vmul.f32 %v1272, 0.5
    %v1324 = vmul.f32 %v1276, 0.5
    %v1325 = vmul.f32 %v1278, 0.5
    %v1326 = vmul.f32 %v1280, 0.5
    %v1327 = vmul.f32 %v1282, 0.5
    %v1328 = vmul.f32 %v1286, 0.5
    %v1329 = vmul.f32 %v1288, 0.5
    %v1330 = vmul.f32 %v1290, 0.5
    %v1331 = vmul.f32 %v1292, 0.5
    %v1332 = vmul.f32 %v1296, 0.5
    %v1333 = vmul.f32 %v1298, 0.5
    %v1334 = vmul.f32 %v1300, 0.5
    %v1335 = vmul.f32 %v1302, 0.5
    %v1336 = vtanh.pop %v1304
    %v1337 = vtanh.pop %v1305
    %v1338 = vtanh.pop %v1306
    %v1339 = vtanh.pop %v1307
    %v1340 = vtanh.pop %v1308
    %v1341 = vtanh.pop %v1309
    %v1342 = vtanh.pop %v1310
    %v1343 = vtanh.pop %v1311
    %v1344 = vtanh.pop %v1312
    %v1345 = vtanh.pop %v1313
    %v1346 = vtanh.pop %v1314
    %v1347 = vtanh.pop %v1315
    %v1348 = vtanh.pop %v1316
    %v1349 = vtanh.pop %v1317
    %v1350 = vtanh.pop %v1318
    %v1351 = vtanh.pop %v1319
    %v1352 = vtanh.pop %v1320
    %v1353 = vtanh.pop %v1321
    %v1354 = vtanh.pop %v1322
    %v1355 = vtanh.pop %v1323
    %v1356 = vtanh.pop %v1324
    %v1357 = vtanh.pop %v1325
    %v1358 = vtanh.pop %v1326
    %v1359 = vtanh.pop %v1327
    %v1360 = vtanh.pop %v1328
    %v1361 = vtanh.pop %v1329
    %v1362 = vtanh.pop %v1330
    %v1363 = vtanh.pop %v1331
    %v1364 = vtanh.pop %v1332
    %v1365 = vtanh.pop %v1333
    %v1366 = vtanh.pop %v1334
    %v1367 = vtanh.pop %v1335
    %v1368 = vmul.f32 %v1336, 0.5
    %v1369 = vmul.f32 %v1337, 0.5
    %v1370 = vmul.f32 %v1338, 0.5
    %v1371 = vmul.f32 %v1339, 0.5
    %v1372 = vmul.f32 %v1340, 0.5
    %v1373 = vmul.f32 %v1341, 0.5
    %v1374 = vmul.f32 %v1342, 0.5
    %v1375 = vmul.f32 %v1343, 0.5
    %v1376 = vmul.f32 %v1344, 0.5
    %v1377 = vmul.f32 %v1345, 0.5
    %v1378 = vmul.f32 %v1346, 0.5
    %v1379 = vmul.f32 %v1347, 0.5
    %v1380 = vmul.f32 %v1348, 0.5
    %v1381 = vmul.f32 %v1349, 0.5
    %v1382 = vmul.f32 %v1350, 0.5
    %v1383 = vmul.f32 %v1351, 0.5
    %v1384 = vmul.f32 %v1352, 0.5
    %v1385 = vmul.f32 %v1353, 0.5
    %v1386 = vmul.f32 %v1354, 0.5
    %v1387 = vmul.f32 %v1355, 0.5
    %v1388 = vmul.f32 %v1356, 0.5
    %v1389 = vmul.f32 %v1357, 0.5
    %v1390 = vmul.f32 %v1358, 0.5
    %v1391 = vmul.f32 %v1359, 0.5
    %v1392 = vmul.f32 %v1360, 0.5
    %v1393 = vmul.f32 %v1361, 0.5
    %v1394 = vmul.f32 %v1362, 0.5
    %v1395 = vmul.f32 %v1363, 0.5
    %v1396 = vmul.f32 %v1364, 0.5
    %v1397 = vmul.f32 %v1365, 0.5
    %v1398 = vmul.f32 %v1366, 0.5
    %v1399 = vmul.f32 %v1367, 0.5
    %v1400 = vadd.f32 %v1368, 0.5
    %v1401 = vadd.f32 %v1369, 0.5
    %v1402 = vadd.f32 %v1370, 0.5
    %v1403 = vadd.f32 %v1371, 0.5
    %v1404 = vadd.f32 %v1372, 0.5
    %v1405 = vadd.f32 %v1373, 0.5
    %v1406 = vadd.f32 %v1374, 0.5
    %v1407 = vadd.f32 %v1375, 0.5
    %v1408 = vadd.f32 %v1376, 0.5
    %v1409 = vadd.f32 %v1377, 0.5
    %v1410 = vadd.f32 %v1378, 0.5
    %v1411 = vadd.f32 %v1379, 0.5
    %v1412 = vadd.f32 %v1380, 0.5
    %v1413 = vadd.f32 %v1381, 0.5
    %v1414 = vadd.f32 %v1382, 0.5
    %v1415 = vadd.f32 %v1383, 0.5
    %v1416 = vadd.f32 %v1384, 0.5
    %v1417 = vadd.f32 %v1385, 0.5
    %v1418 = vadd.f32 %v1386, 0.5
    %v1419 = vadd.f32 %v1387, 0.5
    %v1420 = vadd.f32 %v1388, 0.5
    %v1421 = vadd.f32 %v1389, 0.5
    %v1422 = vadd.f32 %v1390, 0.5
    %v1423 = vadd.f32 %v1391, 0.5
    %v1424 = vadd.f32 %v1392, 0.5
    %v1425 = vadd.f32 %v1393, 0.5
    %v1426 = vadd.f32 %v1394, 0.5
    %v1427 = vadd.f32 %v1395, 0.5
    %v1428 = vadd.f32 %v1396, 0.5
    %v1429 = vadd.f32 %v1397, 0.5
    %v1430 = vadd.f32 %v1398, 0.5
    %v1431 = vadd.f32 %v1399, 0.5
    %v1432 = vmul.f32 %v1226, %v1400
    %v1433 = vmul.f32 %v1228, %v1401
    %v1434 = vmul.f32 %v1230, %v1402
    %v1435 = vmul.f32 %v1232, %v1403
    %v1436 = vmul.f32 %v1236, %v1404
    %v1437 = vmul.f32 %v1238, %v1405
    %v1438 = vmul.f32 %v1240, %v1406
    %v1439 = vmul.f32 %v1242, %v1407
    %v1440 = vmul.f32 %v1246, %v1408
    %v1441 = vmul.f32 %v1248, %v1409
    %v1442 = vmul.f32 %v1250, %v1410
    %v1443 = vmul.f32 %v1252, %v1411
    %v1444 = vmul.f32 %v1256, %v1412
    %v1445 = vmul.f32 %v1258, %v1413
    %v1446 = vmul.f32 %v1260, %v1414
    %v1447 = vmul.f32 %v1262, %v1415
    %v1448 = vmul.f32 %v1266, %v1416
    %v1449 = vmul.f32 %v1268, %v1417
    %v1450 = vmul.f32 %v1270, %v1418
    %v1451 = vmul.f32 %v1272, %v1419
    %v1452 = vmul.f32 %v1276, %v1420
    %v1453 = vmul.f32 %v1278, %v1421
    %v1454 = vmul.f32 %v1280, %v1422
    %v1455 = vmul.f32 %v1282, %v1423
    %v1456 = vmul.f32 %v1286, %v1424
    %v1457 = vmul.f32 %v1288, %v1425
    %v1458 = vmul.f32 %v1290, %v1426
    %v1459 = vmul.f32 %v1292, %v1427
    %v1460 = vmul.f32 %v1296, %v1428
    %v1461 = vmul.f32 %v1298, %v1429
    %v1462 = vmul.f32 %v1300, %v1430
    %v1463 = vmul.f32 %v1302, %v1431
    %v1464 = vpack.c.bf16 %v1434, %v1432
    %v1465 = vpack.c.bf16 %v1435, %v1433
    %v1466 = vpack.c.bf16 %v1438, %v1436
    %v1467 = vpack.c.bf16 %v1439, %v1437
    %v1468 = vpack.c.bf16 %v1442, %v1440
    %v1469 = vpack.c.bf16 %v1443, %v1441
    %v1470 = vpack.c.bf16 %v1446, %v1444
    %v1471 = vpack.c.bf16 %v1447, %v1445
    %v1472 = vpack.c.bf16 %v1450, %v1448
    %v1473 = vpack.c.bf16 %v1451, %v1449
    %v1474 = vpack.c.bf16 %v1454, %v1452
    %v1475 = vpack.c.bf16 %v1455, %v1453
    %v1476 = vpack.c.bf16 %v1458, %v1456
    %v1477 = vpack.c.bf16 %v1459, %v1457
    %v1478 = vpack.c.bf16 %v1462, %v1460
    %v1479 = vpack.c.bf16 %v1463, %v1461
    %v1480 = vld [vmem:[%s5] sm:$0xf]
    %v1481 = vld [vmem:[%s5 + $0x4] sm:$0xf]
    %v1482 = vld [vmem:[%s5 + $0x8] sm:$0xf]
    %v1483 = vld [vmem:[%s5 + $0xc] sm:$0xf]
    %v1484 = vld [vmem:[%s5 + $0x10] sm:$0xf]
    %v1485 = vld [vmem:[%s5 + $0x14] sm:$0xf]
    %v1486 = vld [vmem:[%s5 + $0x18] sm:$0xf]
    %v1487 = vld [vmem:[%s5 + $0x1c] sm:$0xf]
    %v1488 = vld [vmem:[%s6] sm:$0xff]
    %v1489 = vld [vmem:[%s6 + $0x8] sm:$0xff]
    %v1490 = vld [vmem:[%s6 + $0x10] sm:$0xff]
    %v1491 = vld [vmem:[%s6 + $0x18] sm:$0xff]
    %v1492 = vld [vmem:[%s6 + $0x20] sm:$0xff]
    %v1493 = vld [vmem:[%s6 + $0x28] sm:$0xff]
    %v1494 = vld [vmem:[%s6 + $0x30] sm:$0xff]
    %v1495 = vld [vmem:[%s6 + $0x38] sm:$0xff]
    %1497 = vset.pattern.permute.xlu0 0
    %1498 = vperm.xlu0 %1497, %v1488
    %v1499 = vpop.permute.xlu0 %1498
    %1502 = vset.pattern.permute.xlu0 0
    %1503 = vperm.xlu0 %1502, %v1489
    %v1504 = vpop.permute.xlu0 %1503
    %1507 = vset.pattern.permute.xlu0 0
    %1508 = vperm.xlu0 %1507, %v1490
    %v1509 = vpop.permute.xlu0 %1508
    %1512 = vset.pattern.permute.xlu0 0
    %1513 = vperm.xlu0 %1512, %v1491
    %v1514 = vpop.permute.xlu0 %1513
    %1517 = vset.pattern.permute.xlu0 0
    %1518 = vperm.xlu0 %1517, %v1492
    %v1519 = vpop.permute.xlu0 %1518
    %1522 = vset.pattern.permute.xlu0 0
    %1523 = vperm.xlu0 %1522, %v1493
    %v1524 = vpop.permute.xlu0 %1523
    %1527 = vset.pattern.permute.xlu0 0
    %1528 = vperm.xlu0 %1527, %v1494
    %v1529 = vpop.permute.xlu0 %1528
    %1532 = vset.pattern.permute.xlu0 0
    %1533 = vperm.xlu0 %1532, %v1495
    %v1534 = vpop.permute.xlu0 %1533
    %v1544 = vunpack.c.l.b16 %v1480
    %v1545 = vunpack.c.l.b16 %v1481
    %v1546 = vunpack.c.l.b16 %v1482
    %v1547 = vunpack.c.l.b16 %v1483
    %v1548 = vunpack.c.l.b16 %v1484
    %v1549 = vunpack.c.l.b16 %v1485
    %v1550 = vunpack.c.l.b16 %v1486
    %v1551 = vunpack.c.l.b16 %v1487
    %v1552 = vpack.c.b16 %v1545, %v1544
    %v1553 = vpack.c.b16 %v1547, %v1546
    %v1554 = vpack.c.b16 %v1549, %v1548
    %v1555 = vpack.c.b16 %v1551, %v1550
    %1560 = vmatprep.subr.bf16.mxu0 %v1465
    %1561 = vmatpush1.bf16.msra.mxu0 %v1464
    %1562 = vmatprep.subr.bf16.mxu0 %v1467
    %1563 = vmatpush1.bf16.msra.mxu0 %v1466
    %1564 = vmatprep.subr.bf16.mxu0 %v1469
    %1565 = vmatpush1.bf16.msra.mxu0 %v1468
    %1566 = vmatprep.subr.bf16.mxu0 %v1471
    %1567 = vmatpush1.bf16.msra.mxu0 %v1470
    %1568 = vmatprep.subr.bf16.mxu0 %v1473
    %1569 = vmatpush1.bf16.msra.mxu0 %v1472
    %1570 = vmatprep.subr.bf16.mxu0 %v1475
    %1571 = vmatpush1.bf16.msra.mxu0 %v1474
    %1572 = vmatprep.subr.bf16.mxu0 %v1477
    %1573 = vmatpush1.bf16.msra.mxu0 %v1476
    %1574 = vmatprep.subr.bf16.mxu0 %v1479
    %1575 = vmatpush1.bf16.msra.mxu0 %v1478
    %1576 = vmatprep.subr.bf16.mxu0 0
    %1577 = vmatpush1.bf16.msra.mxu0 0
    %1578 = vmatprep.subr.bf16.mxu0 0
    %1579 = vmatpush1.bf16.msra.mxu0 0
    %1580 = vmatprep.subr.bf16.mxu0 0
    %1581 = vmatpush1.bf16.msra.mxu0 0
    %1582 = vmatprep.subr.bf16.mxu0 0
    %1583 = vmatpush1.bf16.msra.mxu0 0
    %1584 = vmatprep.subr.bf16.mxu0 0
    %1585 = vmatpush1.bf16.msra.mxu0 0
    %1586 = vmatprep.subr.bf16.mxu0 0
    %1587 = vmatpush1.bf16.msra.mxu0 0
    %1588 = vmatprep.subr.bf16.mxu0 0
    %1589 = vmatpush1.bf16.msra.mxu0 0
    %1590 = vmatprep.subr.bf16.mxu0 0
    %1591 = vmatpush1.bf16.msra.mxu0 0
    %1592 = vmatprep.mubr.bf16.mxu0 0
    %1593 = vmatmul.mubr.bf16.gmra.mrb[0].mxu0 %v1552
    %v1594 = vpop.f32.mrb[0].mxu0
    %v1595 = vadd.f32 %v1499, %v1594
    %v1596 = vpop.f32.mrb[0].mxu0
    %v1597 = vadd.f32 %v1499, %v1596
    %v1598 = vpop.f32.mrb[0].mxu0
    %v1599 = vadd.f32 %v1504, %v1598
    %v1600 = vpop.f32.mrb[0].mxu0
    %v1601 = vadd.f32 %v1504, %v1600
    %1602 = vmatprep.mubr.bf16.mxu0 0
    %1603 = vmatmul.mubr.bf16.gmra.mrb[0].mxu0 %v1553
    %v1604 = vpop.f32.mrb[0].mxu0
    %v1605 = vadd.f32 %v1509, %v1604
    %v1606 = vpop.f32.mrb[0].mxu0
    %v1607 = vadd.f32 %v1509, %v1606
    %v1608 = vpop.f32.mrb[0].mxu0
    %v1609 = vadd.f32 %v1514, %v1608
    %v1610 = vpop.f32.mrb[0].mxu0
    %v1611 = vadd.f32 %v1514, %v1610
    %1612 = vmatprep.mubr.bf16.mxu0 0
    %1613 = vmatmul.mubr.bf16.gmra.mrb[0].mxu0 %v1554
    %v1614 = vpop.f32.mrb[0].mxu0
    %v1615 = vadd.f32 %v1519, %v1614
    %v1616 = vpop.f32.mrb[0].mxu0
    %v1617 = vadd.f32 %v1519, %v1616
    %v1618 = vpop.f32.mrb[0].mxu0
    %v1619 = vadd.f32 %v1524, %v1618
    %v1620 = vpop.f32.mrb[0].mxu0
    %v1621 = vadd.f32 %v1524, %v1620
    %1622 = vmatprep.mubr.bf16.mxu0 0
    %1623 = vmatmul.mubr.bf16.gmra.mrb[0].mxu0 %v1555
    %v1624 = vpop.f32.mrb[0].mxu0
    %v1625 = vadd.f32 %v1529, %v1624
    %v1626 = vpop.f32.mrb[0].mxu0
    %v1627 = vadd.f32 %v1529, %v1626
    %v1628 = vpop.f32.mrb[0].mxu0
    %v1629 = vadd.f32 %v1534, %v1628
    %v1630 = vpop.f32.mrb[0].mxu0
    %v1631 = vadd.f32 %v1534, %v1630
    %1632 = vdwg.mxu0
    %v1633 = vmul.f32 %v1595, 0.5
    %v1634 = vmul.f32 %v1597, 0.5
    %v1635 = vmul.f32 %v1599, 0.5
    %v1636 = vmul.f32 %v1601, 0.5
    %v1637 = vmul.f32 %v1605, 0.5
    %v1638 = vmul.f32 %v1607, 0.5
    %v1639 = vmul.f32 %v1609, 0.5
    %v1640 = vmul.f32 %v1611, 0.5
    %v1641 = vmul.f32 %v1615, 0.5
    %v1642 = vmul.f32 %v1617, 0.5
    %v1643 = vmul.f32 %v1619, 0.5
    %v1644 = vmul.f32 %v1621, 0.5
    %v1645 = vmul.f32 %v1625, 0.5
    %v1646 = vmul.f32 %v1627, 0.5
    %v1647 = vmul.f32 %v1629, 0.5
    %v1648 = vmul.f32 %v1631, 0.5
    %v1649 = vtanh.pop %v1633
    %v1650 = vtanh.pop %v1634
    %v1651 = vtanh.pop %v1635
    %v1652 = vtanh.pop %v1636
    %v1653 = vtanh.pop %v1637
    %v1654 = vtanh.pop %v1638
    %v1655 = vtanh.pop %v1639
    %v1656 = vtanh.pop %v1640
    %v1657 = vtanh.pop %v1641
    %v1658 = vtanh.pop %v1642
    %v1659 = vtanh.pop %v1643
    %v1660 = vtanh.pop %v1644
    %v1661 = vtanh.pop %v1645
    %v1662 = vtanh.pop %v1646
    %v1663 = vtanh.pop %v1647
    %v1664 = vtanh.pop %v1648
    %v1665 = vmul.f32 %v1649, 0.5
    %v1666 = vmul.f32 %v1650, 0.5
    %v1667 = vmul.f32 %v1651, 0.5
    %v1668 = vmul.f32 %v1652, 0.5
    %v1669 = vmul.f32 %v1653, 0.5
    %v1670 = vmul.f32 %v1654, 0.5
    %v1671 = vmul.f32 %v1655, 0.5
    %v1672 = vmul.f32 %v1656, 0.5
    %v1673 = vmul.f32 %v1657, 0.5
    %v1674 = vmul.f32 %v1658, 0.5
    %v1675 = vmul.f32 %v1659, 0.5
    %v1676 = vmul.f32 %v1660, 0.5
    %v1677 = vmul.f32 %v1661, 0.5
    %v1678 = vmul.f32 %v1662, 0.5
    %v1679 = vmul.f32 %v1663, 0.5
    %v1680 = vmul.f32 %v1664, 0.5
    %v1681 = vadd.f32 %v1665, 0.5
    %v1682 = vadd.f32 %v1666, 0.5
    %v1683 = vadd.f32 %v1667, 0.5
    %v1684 = vadd.f32 %v1668, 0.5
    %v1685 = vadd.f32 %v1669, 0.5
    %v1686 = vadd.f32 %v1670, 0.5
    %v1687 = vadd.f32 %v1671, 0.5
    %v1688 = vadd.f32 %v1672, 0.5
    %v1689 = vadd.f32 %v1673, 0.5
    %v1690 = vadd.f32 %v1674, 0.5
    %v1691 = vadd.f32 %v1675, 0.5
    %v1692 = vadd.f32 %v1676, 0.5
    %v1693 = vadd.f32 %v1677, 0.5
    %v1694 = vadd.f32 %v1678, 0.5
    %v1695 = vadd.f32 %v1679, 0.5
    %v1696 = vadd.f32 %v1680, 0.5
    %v1697 = vmul.f32 %v1595, %v1681
    %v1698 = vmul.f32 %v1597, %v1682
    %v1699 = vmul.f32 %v1599, %v1683
    %v1700 = vmul.f32 %v1601, %v1684
    %v1701 = vmul.f32 %v1605, %v1685
    %v1702 = vmul.f32 %v1607, %v1686
    %v1703 = vmul.f32 %v1609, %v1687
    %v1704 = vmul.f32 %v1611, %v1688
    %v1705 = vmul.f32 %v1615, %v1689
    %v1706 = vmul.f32 %v1617, %v1690
    %v1707 = vmul.f32 %v1619, %v1691
    %v1708 = vmul.f32 %v1621, %v1692
    %v1709 = vmul.f32 %v1625, %v1693
    %v1710 = vmul.f32 %v1627, %v1694
    %v1711 = vmul.f32 %v1629, %v1695
    %v1712 = vmul.f32 %v1631, %v1696
    %v1713 = vpack.c.bf16 %v1699, %v1697
    %v1714 = vpack.c.bf16 %v1700, %v1698
    %v1715 = vpack.c.bf16 %v1703, %v1701
    %v1716 = vpack.c.bf16 %v1704, %v1702
    %v1717 = vpack.c.bf16 %v1707, %v1705
    %v1718 = vpack.c.bf16 %v1708, %v1706
    %v1719 = vpack.c.bf16 %v1711, %v1709
    %v1720 = vpack.c.bf16 %v1712, %v1710
    %v1721 = vld [vmem:[%s7] sm:$0xf]
    %v1722 = vld [vmem:[%s7 + $0x4] sm:$0xf]
    %v1723 = vld [vmem:[%s7 + $0x8] sm:$0xf]
    %v1724 = vld [vmem:[%s7 + $0xc] sm:$0xf]
    %v1725 = vld [vmem:[%s7 + $0x10] sm:$0xf]
    %v1726 = vld [vmem:[%s7 + $0x14] sm:$0xf]
    %v1727 = vld [vmem:[%s8] sm:$0xff]
    %v1728 = vld [vmem:[%s8 + $0x8] sm:$0xff]
    %v1729 = vld [vmem:[%s8 + $0x10] sm:$0xff]
    %v1730 = vld [vmem:[%s8 + $0x18] sm:$0xff]
    %v1731 = vld [vmem:[%s8 + $0x20] sm:$0xff]
    %v1732 = vld [vmem:[%s8 + $0x28] sm:$0xff]
    %1734 = vset.pattern.permute.xlu0 0
    %1735 = vperm.xlu0 %1734, %v1727
    %v1736 = vpop.permute.xlu0 %1735
    %1739 = vset.pattern.permute.xlu0 0
    %1740 = vperm.xlu0 %1739, %v1728
    %v1741 = vpop.permute.xlu0 %1740
    %1744 = vset.pattern.permute.xlu0 0
    %1745 = vperm.xlu0 %1744, %v1729
    %v1746 = vpop.permute.xlu0 %1745
    %1749 = vset.pattern.permute.xlu0 0
    %1750 = vperm.xlu0 %1749, %v1730
    %v1751 = vpop.permute.xlu0 %1750
    %1754 = vset.pattern.permute.xlu0 0
    %1755 = vperm.xlu0 %1754, %v1731
    %v1756 = vpop.permute.xlu0 %1755
    %1759 = vset.pattern.permute.xlu0 0
    %1760 = vperm.xlu0 %1759, %v1732
    %v1761 = vpop.permute.xlu0 %1760
    %v1769 = vunpack.c.l.b16 %v1721
    %v1770 = vunpack.c.l.b16 %v1722
    %v1771 = vunpack.c.l.b16 %v1723
    %v1772 = vunpack.c.l.b16 %v1724
    %v1773 = vunpack.c.l.b16 %v1725
    %v1774 = vunpack.c.l.b16 %v1726
    %v1775 = vpack.c.b16 %v1770, %v1769
    %v1776 = vpack.c.b16 %v1772, %v1771
    %v1777 = vpack.c.b16 %v1774, %v1773
    %vm1778 = vcmask 523264
    %v1780 = vsel %vm1778, %v1775, 0
    %v1783 = vsel %vm1778, %v1776, 0
    %v1786 = vsel %vm1778, %v1777, 0
    %1788 = vmatprep.subr.bf16.mxu0 %v1714
    %1789 = vmatpush1.bf16.msra.mxu0 %v1713
    %1790 = vmatprep.subr.bf16.mxu0 %v1716
    %1791 = vmatpush1.bf16.msra.mxu0 %v1715
    %1792 = vmatprep.subr.bf16.mxu0 %v1718
    %1793 = vmatpush1.bf16.msra.mxu0 %v1717
    %1794 = vmatprep.subr.bf16.mxu0 %v1720
    %1795 = vmatpush1.bf16.msra.mxu0 %v1719
    %1796 = vmatprep.subr.bf16.mxu0 0
    %1797 = vmatpush1.bf16.msra.mxu0 0
    %1798 = vmatprep.subr.bf16.mxu0 0
    %1799 = vmatpush1.bf16.msra.mxu0 0
    %1800 = vmatprep.subr.bf16.mxu0 0
    %1801 = vmatpush1.bf16.msra.mxu0 0
    %1802 = vmatprep.subr.bf16.mxu0 0
    %1803 = vmatpush1.bf16.msra.mxu0 0
    %1804 = vmatprep.subr.bf16.mxu0 0
    %1805 = vmatpush1.bf16.msra.mxu0 0
    %1806 = vmatprep.subr.bf16.mxu0 0
    %1807 = vmatpush1.bf16.msra.mxu0 0
    %1808 = vmatprep.subr.bf16.mxu0 0
    %1809 = vmatpush1.bf16.msra.mxu0 0
    %1810 = vmatprep.subr.bf16.mxu0 0
    %1811 = vmatpush1.bf16.msra.mxu0 0
    %1812 = vmatprep.subr.bf16.mxu0 0
    %1813 = vmatpush1.bf16.msra.mxu0 0
    %1814 = vmatprep.subr.bf16.mxu0 0
    %1815 = vmatpush1.bf16.msra.mxu0 0
    %1816 = vmatprep.subr.bf16.mxu0 0
    %1817 = vmatpush1.bf16.msra.mxu0 0
    %1818 = vmatprep.subr.bf16.mxu0 0
    %1819 = vmatpush1.bf16.msra.mxu0 0
    %1820 = vmatprep.mubr.bf16.mxu0 0
    %1821 = vmatmul.mubr.bf16.gmra.mrb[0].mxu0 %v1780
    %v1822 = vpop.f32.mrb[0].mxu0
    %v1823 = vadd.f32 %v1736, %v1822
    %v1824 = vpop.f32.mrb[0].mxu0
    %v1825 = vadd.f32 %v1736, %v1824
    %v1826 = vpop.f32.mrb[0].mxu0
    %v1827 = vadd.f32 %v1741, %v1826
    %v1828 = vpop.f32.mrb[0].mxu0
    %v1829 = vadd.f32 %v1741, %v1828
    %1830 = vmatprep.mubr.bf16.mxu0 0
    %1831 = vmatmul.mubr.bf16.gmra.mrb[0].mxu0 %v1783
    %v1832 = vpop.f32.mrb[0].mxu0
    %v1833 = vadd.f32 %v1746, %v1832
    %v1834 = vpop.f32.mrb[0].mxu0
    %v1835 = vadd.f32 %v1746, %v1834
    %v1836 = vpop.f32.mrb[0].mxu0
    %v1837 = vadd.f32 %v1751, %v1836
    %v1838 = vpop.f32.mrb[0].mxu0
    %v1839 = vadd.f32 %v1751, %v1838
    %1840 = vmatprep.mubr.bf16.mxu0 0
    %1841 = vmatmul.mubr.bf16.gmra.mrb[0].mxu0 %v1786
    %v1842 = vpop.f32.mrb[0].mxu0
    %v1843 = vadd.f32 %v1756, %v1842
    %v1844 = vpop.f32.mrb[0].mxu0
    %v1845 = vadd.f32 %v1756, %v1844
    %v1846 = vpop.f32.mrb[0].mxu0
    %v1847 = vadd.f32 %v1761, %v1846
    %v1848 = vpop.f32.mrb[0].mxu0
    %v1849 = vadd.f32 %v1761, %v1848
    %1850 = vdwg.mxu0
    %v1851 = vmul.f32 %v1823, 0.5
    %v1852 = vmul.f32 %v1825, 0.5
    %v1853 = vmul.f32 %v1827, 0.5
    %v1854 = vmul.f32 %v1829, 0.5
    %v1855 = vmul.f32 %v1833, 0.5
    %v1856 = vmul.f32 %v1835, 0.5
    %v1857 = vmul.f32 %v1837, 0.5
    %v1858 = vmul.f32 %v1839, 0.5
    %v1859 = vmul.f32 %v1843, 0.5
    %v1860 = vmul.f32 %v1845, 0.5
    %v1861 = vmul.f32 %v1847, 0.5
    %v1862 = vmul.f32 %v1849, 0.5
    %v1863 = vtanh.pop %v1851
    %v1864 = vtanh.pop %v1852
    %v1865 = vtanh.pop %v1853
    %v1866 = vtanh.pop %v1854
    %v1867 = vtanh.pop %v1855
    %v1868 = vtanh.pop %v1856
    %v1869 = vtanh.pop %v1857
    %v1870 = vtanh.pop %v1858
    %v1871 = vtanh.pop %v1859
    %v1872 = vtanh.pop %v1860
    %v1873 = vtanh.pop %v1861
    %v1874 = vtanh.pop %v1862
    %v1875 = vmul.f32 %v1863, 0.5
    %v1876 = vmul.f32 %v1864, 0.5
    %v1877 = vmul.f32 %v1865, 0.5
    %v1878 = vmul.f32 %v1866, 0.5
    %v1879 = vmul.f32 %v1867, 0.5
    %v1880 = vmul.f32 %v1868, 0.5
    %v1881 = vmul.f32 %v1869, 0.5
    %v1882 = vmul.f32 %v1870, 0.5
    %v1883 = vmul.f32 %v1871, 0.5
    %v1884 = vmul.f32 %v1872, 0.5
    %v1885 = vmul.f32 %v1873, 0.5
    %v1886 = vmul.f32 %v1874, 0.5
    %v1887 = vadd.f32 %v1875, 0.5
    %v1888 = vadd.f32 %v1876, 0.5
    %v1889 = vadd.f32 %v1877, 0.5
    %v1890 = vadd.f32 %v1878, 0.5
    %v1891 = vadd.f32 %v1879, 0.5
    %v1892 = vadd.f32 %v1880, 0.5
    %v1893 = vadd.f32 %v1881, 0.5
    %v1894 = vadd.f32 %v1882, 0.5
    %v1895 = vadd.f32 %v1883, 0.5
    %v1896 = vadd.f32 %v1884, 0.5
    %v1897 = vadd.f32 %v1885, 0.5
    %v1898 = vadd.f32 %v1886, 0.5
    %v1899 = vmul.f32 %v1823, %v1887
    %v1900 = vmul.f32 %v1825, %v1888
    %v1901 = vmul.f32 %v1827, %v1889
    %v1902 = vmul.f32 %v1829, %v1890
    %v1903 = vmul.f32 %v1833, %v1891
    %v1904 = vmul.f32 %v1835, %v1892
    %v1905 = vmul.f32 %v1837, %v1893
    %v1906 = vmul.f32 %v1839, %v1894
    %v1907 = vmul.f32 %v1843, %v1895
    %v1908 = vmul.f32 %v1845, %v1896
    %v1909 = vmul.f32 %v1847, %v1897
    %v1910 = vmul.f32 %v1849, %v1898
    %v1911 = vpack.c.bf16 %v1901, %v1899
    %v1912 = vpack.c.bf16 %v1902, %v1900
    %v1913 = vpack.c.bf16 %v1905, %v1903
    %v1914 = vpack.c.bf16 %v1906, %v1904
    %v1915 = vpack.c.bf16 %v1909, %v1907
    %v1916 = vpack.c.bf16 %v1910, %v1908
    %v1917 = vld [vmem:[%s9] sm:$0x1]
    %v1918 = vld [vmem:[#allocation2] sm:$0x1]
    %1920 = vset.pattern.permute.xlu0 0
    %1921 = vperm.xlu0 %1920, %v1918
    %v1922 = vpop.permute.xlu0 %1921
    %v1924 = vlaneseq
    %v1925 = vshrl.u32 %v1924, 7
    %v1926 = vsub.s32 0, %v1925
    %v1927 = vrot.slane %v1922, %v1926
    %vm1928 = vcmask 392192
    %v1930 = vsel %vm1928, %v1917, 0
    %1932 = vmatprep.subr.bf16.mxu0 %v1912
    %1933 = vmatpush1.bf16.msra.mxu0 %v1911
    %1934 = vmatprep.subr.bf16.mxu0 %v1914
    %1935 = vmatpush1.bf16.msra.mxu0 %v1913
    %1936 = vmatprep.subr.bf16.mxu0 %v1916
    %1937 = vmatpush1.bf16.msra.mxu0 %v1915
    %1938 = vmatprep.subr.bf16.mxu0 0
    %1939 = vmatpush1.bf16.msra.mxu0 0
    %1940 = vmatprep.subr.bf16.mxu0 0
    %1941 = vmatpush1.bf16.msra.mxu0 0
    %1942 = vmatprep.subr.bf16.mxu0 0
    %1943 = vmatpush1.bf16.msra.mxu0 0
    %1944 = vmatprep.subr.bf16.mxu0 0
    %1945 = vmatpush1.bf16.msra.mxu0 0
    %1946 = vmatprep.subr.bf16.mxu0 0
    %1947 = vmatpush1.bf16.msra.mxu0 0
    %1948 = vmatprep.subr.bf16.mxu0 0
    %1949 = vmatpush1.bf16.msra.mxu0 0
    %1950 = vmatprep.subr.bf16.mxu0 0
    %1951 = vmatpush1.bf16.msra.mxu0 0
    %1952 = vmatprep.subr.bf16.mxu0 0
    %1953 = vmatpush1.bf16.msra.mxu0 0
    %1954 = vmatprep.subr.bf16.mxu0 0
    %1955 = vmatpush1.bf16.msra.mxu0 0
    %1956 = vmatprep.subr.bf16.mxu0 0
    %1957 = vmatpush1.bf16.msra.mxu0 0
    %1958 = vmatprep.subr.bf16.mxu0 0
    %1959 = vmatpush1.bf16.msra.mxu0 0
    %1960 = vmatprep.subr.bf16.mxu0 0
    %1961 = vmatpush1.bf16.msra.mxu0 0
    %1962 = vmatprep.subr.bf16.mxu0 0
    %1963 = vmatpush1.bf16.msra.mxu0 0
    %1964 = vmatprep.mubr.bf16.mxu0 0
    %1965 = vmatmul.mubr.bf16.gmra.mrb[0].mxu0 %v1930
    %v1966 = vpop.f32.mrb[0].mxu0
    %v1967 = vadd.f32 %v1927, %v1966
    %v1968 = vpop.f32.mrb[0].mxu0
    %v1969 = vadd.f32 %v1927, %v1968
    %v1970 = vpop.f32.mrb[0].mxu0
    %v1971 = vpop.f32.mrb[0].mxu0
    %1972 = vdwg.mxu0
    %v1973 = vmul.f32 %v1967, 0.5
    %v1974 = vmul.f32 %v1969, 0.5
    %v1975 = vtanh.pop %v1973
    %v1976 = vtanh.pop %v1974
    %v1977 = vmul.f32 %v1975, 0.5
    %v1978 = vmul.f32 %v1976, 0.5
    %v1979 = vadd.f32 %v1977, 0.5
    %v1980 = vadd.f32 %v1978, 0.5
    %v1983 = vcombine.low %v1979, %v1980
    %v1985 = vunpack.c.l.s4 1966171168
    %v1986 = vunpack.c.0.s8 %v1985
    %v1987 = vlaneseq
    %v1988 = vshrl.u32 %v1987, 7
    %v1989 = vsub.s32 %v1986, %v1988
    %v1990 = vrot.slane %v1983, %v1989
    %v1992 = vunpack.c.l.s4 1966171168
    %v1993 = vunpack.c.0.s8 %v1992
    %v1994 = vlaneseq
    %v1995 = vshrl.u32 %v1994, 7
    %v1996 = vsub.s32 %v1993, %v1995
    %v1997 = vrot.slane %v1990, %v1996
    %v1999 = vlaneseq
    %vm2000 = vcmp.ge.s32.totalorder %v1999, 0
    %vm2001 = vcmp.lt.s32.totalorder %v1999, 256
    %vm2002 = vmand %vm2000, %vm2001
    %2003 = vst.msk [vmem:[#allocation3] sm:$0x3] %vm2002, %v1997
    // Predicated region
    $region46: #{tpu_custom_call.1} parent=1 // pred_check
      _
    $region47: #{tpu_custom_call.1} parent=1 // pred_check_branch
      %2005 = sbr.rel (0) target = $region49
    $region48: #{tpu_custom_call.1} parent=1 // pred_region
      %s2007 = ssub.s32 32, 32
      %2008 = vsyncadd [#allocation4], %s2007
      %s2010 = sshll.u32 [#allocation3], 4
      %s2011 = int_to_ptr.vmem [resolvable:$true] %s2010
      %2013 = dma.vmem_to_hbm [thread:$0]  %s2011, 32, %s11, [#allocation4]
    $region49: #{tpu_custom_call.1} parent=1 // pred_fallthru
      _
    // Predicated region
    $region50: #{tpu_custom_call.1} parent=1 // pred_check
      _
    $region51: #{tpu_custom_call.1} parent=1 // pred_check_branch
      %2015 = sbr.rel (0) target = $region53
    $region52: #{tpu_custom_call.1} parent=1 // pred_region
      %2016 = dma.done [#allocation4], 32
    $region53: #{tpu_custom_call.1} parent=1 // pred_fallthru
      _
    %2017 = vsyncpa [#allocation4], 1

</llo_original>
